<compile_context>
chip_gen: v5e
topology: v5e:2x2
jax: 0.10.0
libtpu: 0.0.40
codegen_flags: <defaults>
</compile_context>

<pallas_src>
import math

import jax
import jax.numpy as jnp
from jax.experimental import pallas as pl
from jax.experimental.pallas import tpu as pltpu

# ---------------- mini-BERT config (synthetic, small) ----------------
VOCAB = 100
TYPE_VOCAB = 2
MAX_POS = 16
HIDDEN = 32
N_HEADS = 2
HEAD_DIM = HIDDEN // N_HEADS
INTERMEDIATE = 64
N_LAYERS = 2
NUM_TAGS = 5
TAGS_PAD = 8            # tag axis padded to 8 for aligned CRF math
TAGS_OUT = 128          # tag-head output padded to a full 128-lane slab (unmasked stores)
LN_EPS = 1e-12
NEG = -1e9

SLAB_W = 128            # small-parameter slab: one vector per row, zero-padded to 128 lanes
# slab rows: 0 emb_ln_g | 1 emb_ln_b | 2 fc_b | 3 crf_start | 4 crf_end | 5-7 pad
#            8-15 crf_trans (8x8) | 16+8*l+k per-layer [bqkv,bo,ln1g,ln1b,b1,b2,ln2g,ln2b]
SLAB_LAYER_BASE = 16

# TODO(synk): pretrained 'bert-base-multilingual-cased' weights are not loadable here;
# parameters are initialized deterministically in-script instead.


# ---------------- in-kernel helpers ----------------
def _layer_norm(x, g, b):
    mu = jnp.mean(x, axis=-1, keepdims=True)
    var = jnp.mean((x - mu) ** 2, axis=-1, keepdims=True)
    return (x - mu) * jax.lax.rsqrt(var + LN_EPS) * g + b


def _gelu(x):
    # TODO(synk): tanh-approx GELU; HF BertIntermediate default is exact erf GELU (small drift).
    return 0.5 * x * (1.0 + jnp.tanh(0.7978845608028654 * (x + 0.044715 * x * x * x)))


# ---------------- the fused kernel ----------------
def _bert_crf_kernel(
    emb_ref, mask_ref, tags_ref, vslab_ref,
    wqkv_ref, wo_ref, w1_ref, w2_ref, fc_w_ref,
    out_ref,
):
    B, S = mask_ref.shape
    H, NH, DH, T8 = HIDDEN, N_HEADS, HEAD_DIM, TAGS_PAD
    BS = B * S
    scale = 1.0 / math.sqrt(DH)

    def vrow(r, w):                               # static (1, w) slice of the parameter slab
        return vslab_ref[r:r + 1, :w]

    # ---- embedding LayerNorm ----
    x = _layer_norm(emb_ref[...], vrow(0, H), vrow(1, H))                     # (BS, H)

    # ---- attention mask bias, hoisted once; heads are folded into the batch dim ----
    mask = mask_ref[...]                                                       # (B, S) float
    mask_bh = jnp.concatenate([mask] * NH, axis=0)                             # (NH*B, S)
    bias_bh = ((1.0 - mask_bh) * NEG)[:, None, :]                              # (NH*B, 1, S)
    # NOTE: -1e9 bias is safe because at least one key per sequence is unmasked.

    # ---- encoder layers ----
    for l in range(N_LAYERS):
        r0 = SLAB_LAYER_BASE + 8 * l
        # fused QKV; wqkv columns are packed head-major: [q_h|k_h|v_h] per head, each DH wide.
        qkv = jnp.dot(x, wqkv_ref[l], preferred_element_type=jnp.float32) + vrow(r0 + 0, 3 * H)
        # fold heads into the batch dim -> single batched einsum for all heads
        hs = jnp.concatenate([qkv[:, h * 3 * DH:(h + 1) * 3 * DH] for h in range(NH)],
                             axis=0)                                           # (NH*BS, 3*DH)
        qb = hs[:, 0 * DH:1 * DH].reshape(NH * B, S, DH)
        kb = hs[:, 1 * DH:2 * DH].reshape(NH * B, S, DH)
        vb = hs[:, 2 * DH:3 * DH].reshape(NH * B, S, DH)
        s = jnp.einsum('bqd,bkd->bqk', qb, kb,
                       preferred_element_type=jnp.float32) * scale + bias_bh   # (NH*B, S, S)
        s = s - jnp.max(s, axis=-1, keepdims=True)
        p = jnp.exp(s)
        p = p * pl.reciprocal(jnp.sum(p, axis=-1, keepdims=True), approx=True)
        ctx = jnp.einsum('bqk,bkd->bqd', p, vb,
                         preferred_element_type=jnp.float32).reshape(NH * BS, DH)
        ctx = jnp.concatenate([ctx[h * BS:(h + 1) * BS] for h in range(NH)], axis=-1)   # (BS, H)
        attn = jnp.dot(ctx, wo_ref[l], preferred_element_type=jnp.float32) + vrow(r0 + 1, H)
        x = _layer_norm(x + attn, vrow(r0 + 2, H), vrow(r0 + 3, H))
        hff = _gelu(jnp.dot(x, w1_ref[l], preferred_element_type=jnp.float32)
                    + vrow(r0 + 4, INTERMEDIATE))
        ffn = jnp.dot(hff, w2_ref[l], preferred_element_type=jnp.float32) + vrow(r0 + 5, H)
        x = _layer_norm(x + ffn, vrow(r0 + 6, H), vrow(r0 + 7, H))

    # ---- tag head: lane-dense (BS, 128); columns >= NUM_TAGS are zero-padded ----
    em_pad = jnp.dot(x, fc_w_ref[...], preferred_element_type=jnp.float32) + vrow(2, TAGS_OUT)

    # ---- CRF negative log-likelihood on the 8-wide padded tag axis ----
    # Assumes a contiguous-prefix attention mask with mask[:, 0] == 1 (torchcrf's assumption).
    em8 = em_pad[:, :T8].reshape(B, S, T8)                                     # (B, S, 8)
    tg = (tags_ref[...] ==
          jax.lax.broadcasted_iota(jnp.int32, (B, S, T8), 2)).astype(jnp.float32)  # one-hot
    trans8 = vslab_ref[8:16, :T8]                                              # (8, 8)
    start8 = vrow(3, T8)                                                       # (1, 8)
    end8 = vrow(4, T8)                                                         # (1, 8)

    # numerator: target-path score, vectorised over time
    e_all = jnp.sum(em8 * tg, axis=-1)                                         # (B, S)
    step_all = jnp.dot(tg.reshape(BS, T8), trans8,
                       preferred_element_type=jnp.float32).reshape(B, S, T8)   # trans from tag_i
    t_all = jnp.sum(step_all[:, :S - 1, :] * tg[:, 1:, :], axis=-1)            # (B, S-1)
    mask_t = mask[:, 1:]                                                       # (B, S-1)
    num = (jnp.sum(start8 * tg[:, 0, :], axis=-1, keepdims=True)
           + e_all[:, :1]
           + jnp.sum(mask_t * (e_all[:, 1:] + t_all), axis=-1, keepdims=True))
    # end transition from the last unmasked position
    mask_next = jnp.concatenate([mask[:, 1:], jnp.zeros((B, 1), jnp.float32)], axis=-1)
    is_last = mask * (1.0 - mask_next)                                         # (B, S)
    e_end = jnp.sum(tg * end8, axis=-1)                                        # (B, S)
    num = num + jnp.sum(is_last * e_end, axis=-1, keepdims=True)

    # denominator: forward algorithm (inherently sequential over S)
    score = start8 + em8[:, 0, :]                                              # (B, 8)
    for i in range(1, S):
        b3 = score[:, :, None] + trans8[None, :, :] + em8[:, i, :][:, None, :]  # (B, 8, 8)
        m = jnp.max(b3, axis=1, keepdims=True)
        nxt = (m + jnp.log(jnp.sum(jnp.exp(b3 - m), axis=1, keepdims=True)))[:, 0, :]
        score = jnp.where(mask[:, i:i + 1] > 0.0, nxt, score)
    score = score + end8
    m2 = jnp.max(score, axis=-1, keepdims=True)
    denom = jnp.log(jnp.sum(jnp.exp(score - m2), axis=-1, keepdims=True)) + m2  # (B, 1)

    loss = -(jnp.sum(num - denom, axis=0, keepdims=True) / B)                   # (1, 1)

    # ---- single lane-dense output slab: rows [0, BS) emissions, row BS lane 0 = loss ----
    out_ref[:BS, :] = em_pad
    out_ref[BS:, :] = jnp.zeros((8, TAGS_OUT), jnp.float32) + loss


# ---------------- parameters (deterministic synthetic init, pre-packed for the kernel) ----------------
def init_params(key):
    def nrm(k, shape, scale=0.02):
        return (scale * jax.random.normal(k, shape)).astype(jnp.float32)

    keys = jax.random.split(key, 8 + N_LAYERS)

    def row(vec, ):
        r = jnp.zeros((SLAB_W,), jnp.float32)
        return r.at[:vec.shape[0]].set(vec.astype(jnp.float32))

    zeros = lambda n: jnp.zeros((n,), jnp.float32)
    ones = lambda n: jnp.ones((n,), jnp.float32)

    # CRF params, padded to 8 tags with -1e9 so padded tags never win the logsumexp
    trans5 = nrm(keys[4], (NUM_TAGS, NUM_TAGS), 0.1)
    start5 = nrm(keys[5], (NUM_TAGS,), 0.1)
    end5 = nrm(keys[6], (NUM_TAGS,), 0.1)
    trans8 = jnp.full((TAGS_PAD, TAGS_PAD), NEG, jnp.float32).at[:NUM_TAGS, :NUM_TAGS].set(trans5)
    start8 = jnp.full((TAGS_PAD,), NEG, jnp.float32).at[:NUM_TAGS].set(start5)
    end8 = jnp.full((TAGS_PAD,), NEG, jnp.float32).at[:NUM_TAGS].set(end5)

    rows = [
        row(ones(HIDDEN)),            # 0: emb_ln_g
        row(zeros(HIDDEN)),           # 1: emb_ln_b
        row(zeros(TAGS_OUT)),         # 2: fc_b (lane-dense)
        row(start8),                  # 3: crf start
        row(end8),                    # 4: crf end
        row(zeros(1)), row(zeros(1)), row(zeros(1)),   # 5-7: pad
    ]
    rows += [row(trans8[i]) for i in range(TAGS_PAD)]  # 8-15: crf transitions

    wqkv, wo, w1, w2 = [], [], [], []
    for li in range(N_LAYERS):
        lk = jax.random.split(keys[8 + li], 6)
        wq = nrm(lk[0], (HIDDEN, HIDDEN))
        wk = nrm(lk[1], (HIDDEN, HIDDEN))
        wv = nrm(lk[2], (HIDDEN, HIDDEN))
        # head-major fused QKV columns: [q_h0 k_h0 v_h0 | q_h1 k_h1 v_h1]
        blocks = []
        for h in range(N_HEADS):
            sl = slice(h * HEAD_DIM, (h + 1) * HEAD_DIM)
            blocks += [wq[:, sl], wk[:, sl], wv[:, sl]]
        wqkv.append(jnp.concatenate(blocks, axis=1))                           # (H, 3H)
        wo.append(nrm(lk[3], (HIDDEN, HIDDEN)))
        w1.append(nrm(lk[4], (HIDDEN, INTERMEDIATE)))
        w2.append(nrm(lk[5], (INTERMEDIATE, HIDDEN)))
        rows += [
            row(zeros(3 * HIDDEN)),   # bqkv
            row(zeros(HIDDEN)),       # bo
            row(ones(HIDDEN)),        # ln1_g
            row(zeros(HIDDEN)),       # ln1_b
            row(zeros(INTERMEDIATE)), # b1
            row(zeros(HIDDEN)),       # b2
            row(ones(HIDDEN)),        # ln2_g
            row(zeros(HIDDEN)),       # ln2_b
        ]

    vslab = jnp.stack(rows, axis=0)                                            # (32, 128)

    fc_w = jnp.zeros((HIDDEN, TAGS_OUT), jnp.float32).at[:, :NUM_TAGS].set(
        nrm(keys[3], (HIDDEN, NUM_TAGS)))

    return {
        "word_emb": nrm(keys[0], (VOCAB, HIDDEN)),
        "pos_emb": nrm(keys[1], (MAX_POS, HIDDEN)),
        "type_emb": nrm(keys[2], (TYPE_VOCAB, HIDDEN)),
        "vslab": vslab,
        "wqkv": jnp.stack(wqkv), "wo": jnp.stack(wo),
        "w1": jnp.stack(w1), "w2": jnp.stack(w2),
        "fc_w": fc_w,
    }


# ---------------- forward: embedding gather in JAX, everything else in one pallas_call ----------------
@jax.jit
def bert_crf_forward(params, input_ids, attention_mask, token_type_ids, target_tags):
    B, S = input_ids.shape
    emb = (jnp.take(params["word_emb"], input_ids, axis=0)
           + params["pos_emb"][None, :S, :]
           + jnp.take(params["type_emb"], token_type_ids, axis=0))
    emb = emb.reshape(B * S, HIDDEN).astype(jnp.float32)

    mask_f = attention_mask.astype(jnp.float32)          # (B, S) contiguous prefix, mask[:,0]==1
    tags = target_tags.astype(jnp.int32)[:, :, None]      # (B, S, 1); one-hot built in-kernel

    n_in = 9
    out = pl.pallas_call(
        _bert_crf_kernel,
        out_shape=jax.ShapeDtypeStruct((B * S + 8, TAGS_OUT), jnp.float32),
        in_specs=[pl.BlockSpec(memory_space=pltpu.MemorySpace.VMEM)] * n_in,
        out_specs=pl.BlockSpec(memory_space=pltpu.MemorySpace.VMEM),
    )(emb, mask_f, tags, params["vslab"],
      params["wqkv"], params["wo"], params["w1"], params["w2"], params["fc_w"])

    emissions = out[:B * S, :NUM_TAGS].reshape(B, S, NUM_TAGS)   # drop lane padding in XLA-land
    loss = out[B * S, 0]
    return emissions, loss


if __name__ == "__main__":
    B, S = 2, 8
    key = jax.random.PRNGKey(0)
    k_par, k_ids, k_tags = jax.random.split(key, 3)

    params = init_params(k_par)
    input_ids = jax.random.randint(k_ids, (B, S), 0, VOCAB, dtype=jnp.int32)
    token_type_ids = jnp.zeros((B, S), jnp.int32)
    # contiguous-prefix attention mask; first timestep on for every sequence (CRF requirement)
    attention_mask = jnp.array([[1, 1, 1, 1, 1, 1, 1, 1],
                                [1, 1, 1, 1, 1, 1, 0, 0]], dtype=jnp.int32)
    target_tags = jax.random.randint(k_tags, (B, S), 0, NUM_TAGS, dtype=jnp.int32)

    emissions, loss = bert_crf_forward(params, input_ids, attention_mask,
                                       token_type_ids, target_tags)
    jax.block_until_ready((emissions, loss))
    assert emissions.shape == (B, S, NUM_TAGS)
    assert loss.shape == ()
    assert bool(jnp.isfinite(loss))
    print("KERNEL_OK")
</pallas_src>

<mosaic_0001>
module attributes {stable_mosaic.version = 11 : i64} {
  func.func @_bert_crf_kernel(%arg0: memref<16x32xf32, #tpu.memory_space<vmem>>, %arg1: memref<2x8xf32, #tpu.memory_space<vmem>>, %arg2: memref<2x8x1xi32, #tpu.memory_space<vmem>>, %arg3: memref<32x128xf32, #tpu.memory_space<vmem>>, %arg4: memref<2x32x96xf32, #tpu.memory_space<vmem>>, %arg5: memref<2x32x32xf32, #tpu.memory_space<vmem>>, %arg6: memref<2x32x64xf32, #tpu.memory_space<vmem>>, %arg7: memref<2x64x32xf32, #tpu.memory_space<vmem>>, %arg8: memref<32x128xf32, #tpu.memory_space<vmem>>, %arg9: memref<24x128xf32, #tpu.memory_space<vmem>>) attributes {dimension_semantics = [], scalar_prefetch = 0 : i64, scratch_operands = 0 : i64, tpu.core_type = #tpu.core_type<tc>} {
    %c0 = arith.constant 0 : index
    %c0_0 = arith.constant 0 : index
    %0 = vector.load %arg0[%c0, %c0_0] : memref<16x32xf32, #tpu.memory_space<vmem>>, vector<16x32xf32>
    %c0_1 = arith.constant 0 : index
    %c0_2 = arith.constant 0 : index
    %1 = vector.load %arg3[%c0_1, %c0_2] : memref<32x128xf32, #tpu.memory_space<vmem>>, vector<1x32xf32>
    %c1 = arith.constant 1 : index
    %c0_3 = arith.constant 0 : index
    %2 = vector.load %arg3[%c1, %c0_3] : memref<32x128xf32, #tpu.memory_space<vmem>>, vector<1x32xf32>
    %cst = arith.constant dense<0.000000e+00> : vector<16xf32>
    %3 = vector.multi_reduction <add>, %0, %cst [1] : vector<16x32xf32> to vector<16xf32>
    %4 = vector.shape_cast %3 : vector<16xf32> to vector<16x1xf32>
    %cst_4 = arith.constant 3.200000e+01 : f32
    %5 = vector.broadcast %cst_4 : f32 to vector<16x1xf32>
    %6 = arith.divf %4, %5 : vector<16x1xf32>
    %7 = vector.broadcast %6 : vector<16x1xf32> to vector<16x32xf32>
    %8 = arith.subf %0, %7 : vector<16x32xf32>
    %9 = arith.mulf %8, %8 : vector<16x32xf32>
    %cst_5 = arith.constant dense<0.000000e+00> : vector<16xf32>
    %10 = vector.multi_reduction <add>, %9, %cst_5 [1] : vector<16x32xf32> to vector<16xf32>
    %11 = vector.shape_cast %10 : vector<16xf32> to vector<16x1xf32>
    %cst_6 = arith.constant 3.200000e+01 : f32
    %12 = vector.broadcast %cst_6 : f32 to vector<16x1xf32>
    %13 = arith.divf %11, %12 : vector<16x1xf32>
    %14 = vector.broadcast %6 : vector<16x1xf32> to vector<16x32xf32>
    %15 = arith.subf %0, %14 : vector<16x32xf32>
    %cst_7 = arith.constant 9.99999996E-13 : f32
    %16 = vector.broadcast %cst_7 : f32 to vector<16x1xf32>
    %17 = arith.addf %13, %16 : vector<16x1xf32>
    %18 = math.rsqrt %17 : vector<16x1xf32>
    %19 = vector.broadcast %18 : vector<16x1xf32> to vector<16x32xf32>
    %20 = arith.mulf %15, %19 : vector<16x32xf32>
    %21 = vector.broadcast %1 : vector<1x32xf32> to vector<16x32xf32>
    %22 = arith.mulf %20, %21 : vector<16x32xf32>
    %23 = vector.broadcast %2 : vector<1x32xf32> to vector<16x32xf32>
    %24 = arith.addf %22, %23 : vector<16x32xf32>
    %c0_8 = arith.constant 0 : index
    %c0_9 = arith.constant 0 : index
    %25 = vector.load %arg1[%c0_8, %c0_9] : memref<2x8xf32, #tpu.memory_space<vmem>>, vector<2x8xf32>
    %26 = tpu.concatenate %25, %25 in 0 : vector<2x8xf32>, vector<2x8xf32> -> vector<4x8xf32>
    %cst_10 = arith.constant 1.000000e+00 : f32
    %27 = vector.broadcast %cst_10 : f32 to vector<4x8xf32>
    %28 = arith.subf %27, %26 : vector<4x8xf32>
    %cst_11 = arith.constant -1.000000e+09 : f32
    %29 = vector.broadcast %cst_11 : f32 to vector<4x8xf32>
    %30 = arith.mulf %28, %29 : vector<4x8xf32>
    %31 = vector.shape_cast %30 : vector<4x8xf32> to vector<4x1x8xf32>
    %c0_12 = arith.constant 0 : index
    %c0_13 = arith.constant 0 : index
    %c0_14 = arith.constant 0 : index
    %32 = vector.load %arg4[%c0_12, %c0_13, %c0_14] : memref<2x32x96xf32, #tpu.memory_space<vmem>>, vector<1x32x96xf32>
    %33 = vector.shape_cast %32 : vector<1x32x96xf32> to vector<32x96xf32>
    %cst_15 = arith.constant dense<0.000000e+00> : vector<16x96xf32>
    %34 = tpu.matmul %24, %33, %cst_15 {dimension_numbers = #tpu.dot_dimension_numbers<[1], [0], [0], [1], [0, 0, 1, 1], [], []>} : vector<16x32xf32>, vector<32x96xf32>, vector<16x96xf32> -> vector<16x96xf32>
    %c16 = arith.constant 16 : index
    %c0_16 = arith.constant 0 : index
    %35 = vector.load %arg3[%c16, %c0_16] : memref<32x128xf32, #tpu.memory_space<vmem>>, vector<1x96xf32>
    %36 = vector.broadcast %35 : vector<1x96xf32> to vector<16x96xf32>
    %37 = arith.addf %34, %36 : vector<16x96xf32>
    %38 = vector.extract_strided_slice %37 {offsets = [0, 0], sizes = [16, 48], strides = [1, 1]} : vector<16x96xf32> to vector<16x48xf32>
    %39 = vector.extract_strided_slice %37 {offsets = [0, 48], sizes = [16, 48], strides = [1, 1]} : vector<16x96xf32> to vector<16x48xf32>
    %40 = tpu.concatenate %38, %39 in 0 : vector<16x48xf32>, vector<16x48xf32> -> vector<32x48xf32>
    %41 = vector.extract_strided_slice %40 {offsets = [0, 0], sizes = [32, 16], strides = [1, 1]} : vector<32x48xf32> to vector<32x16xf32>
    %42 = vector.shape_cast %41 : vector<32x16xf32> to vector<4x8x16xf32>
    %43 = vector.extract_strided_slice %40 {offsets = [0, 16], sizes = [32, 16], strides = [1, 1]} : vector<32x48xf32> to vector<32x16xf32>
    %44 = vector.shape_cast %43 : vector<32x16xf32> to vector<4x8x16xf32>
    %45 = vector.extract_strided_slice %40 {offsets = [0, 32], sizes = [32, 16], strides = [1, 1]} : vector<32x48xf32> to vector<32x16xf32>
    %46 = vector.shape_cast %45 : vector<32x16xf32> to vector<4x8x16xf32>
    "tpu.trace_start"() <{level = 10 : i32, message = "bqd,bkd->bqk"}> : () -> ()
    %cst_17 = arith.constant dense<0.000000e+00> : vector<4x8x8xf32>
    %47 = tpu.matmul %42, %44, %cst_17 {dimension_numbers = #tpu.dot_dimension_numbers<[2], [2], [1], [1], [0, 0, 0, 1, 1, 1], [0], [0]>} : vector<4x8x16xf32>, vector<4x8x16xf32>, vector<4x8x8xf32> -> vector<4x8x8xf32>
    "tpu.trace_stop"() : () -> ()
    %cst_18 = arith.constant 2.500000e-01 : f32
    %48 = vector.broadcast %cst_18 : f32 to vector<4x8x8xf32>
    %49 = arith.mulf %47, %48 : vector<4x8x8xf32>
    %50 = vector.broadcast %31 : vector<4x1x8xf32> to vector<4x8x8xf32>
    %51 = arith.addf %49, %50 : vector<4x8x8xf32>
    %cst_19 = arith.constant dense<0xFF800000> : vector<4x8xf32>
    %52 = vector.multi_reduction <maximumf>, %51, %cst_19 [2] : vector<4x8x8xf32> to vector<4x8xf32>
    %53 = vector.shape_cast %52 : vector<4x8xf32> to vector<4x8x1xf32>
    %54 = vector.broadcast %53 : vector<4x8x1xf32> to vector<4x8x8xf32>
    %55 = arith.subf %51, %54 : vector<4x8x8xf32>
    %56 = math.exp %55 : vector<4x8x8xf32>
    %cst_20 = arith.constant dense<0.000000e+00> : vector<4x8xf32>
    %57 = vector.multi_reduction <add>, %56, %cst_20 [2] : vector<4x8x8xf32> to vector<4x8xf32>
    %58 = vector.shape_cast %57 : vector<4x8xf32> to vector<4x8x1xf32>
    %59 = tpu.reciprocal %58 {approx = true} : vector<4x8x1xf32> -> vector<4x8x1xf32>
    %60 = vector.broadcast %59 : vector<4x8x1xf32> to vector<4x8x8xf32>
    %61 = arith.mulf %56, %60 : vector<4x8x8xf32>
    "tpu.trace_start"() <{level = 10 : i32, message = "bqk,bkd->bqd"}> : () -> ()
    %cst_21 = arith.constant dense<0.000000e+00> : vector<4x8x16xf32>
    %62 = tpu.matmul %61, %46, %cst_21 {dimension_numbers = #tpu.dot_dimension_numbers<[2], [1], [1], [2], [0, 0, 0, 1, 1, 2], [0], [0]>} : vector<4x8x8xf32>, vector<4x8x16xf32>, vector<4x8x16xf32> -> vector<4x8x16xf32>
    "tpu.trace_stop"() : () -> ()
    %63 = vector.shape_cast %62 : vector<4x8x16xf32> to vector<32x16xf32>
    %64 = vector.extract_strided_slice %63 {offsets = [0, 0], sizes = [16, 16], strides = [1, 1]} : vector<32x16xf32> to vector<16x16xf32>
    %65 = vector.extract_strided_slice %63 {offsets = [16, 0], sizes = [16, 16], strides = [1, 1]} : vector<32x16xf32> to vector<16x16xf32>
    %66 = tpu.concatenate %64, %65 in 1 : vector<16x16xf32>, vector<16x16xf32> -> vector<16x32xf32>
    %c0_22 = arith.constant 0 : index
    %c0_23 = arith.constant 0 : index
    %c0_24 = arith.constant 0 : index
    %67 = vector.load %arg5[%c0_22, %c0_23, %c0_24] : memref<2x32x32xf32, #tpu.memory_space<vmem>>, vector<1x32x32xf32>
    %68 = vector.shape_cast %67 : vector<1x32x32xf32> to vector<32x32xf32>
    %cst_25 = arith.constant dense<0.000000e+00> : vector<16x32xf32>
    %69 = tpu.matmul %66, %68, %cst_25 {dimension_numbers = #tpu.dot_dimension_numbers<[1], [0], [0], [1], [0, 0, 1, 1], [], []>} : vector<16x32xf32>, vector<32x32xf32>, vector<16x32xf32> -> vector<16x32xf32>
    %c17 = arith.constant 17 : index
    %c0_26 = arith.constant 0 : index
    %70 = vector.load %arg3[%c17, %c0_26] : memref<32x128xf32, #tpu.memory_space<vmem>>, vector<1x32xf32>
    %71 = vector.broadcast %70 : vector<1x32xf32> to vector<16x32xf32>
    %72 = arith.addf %69, %71 : vector<16x32xf32>
    %73 = arith.addf %24, %72 : vector<16x32xf32>
    %c18 = arith.constant 18 : index
    %c0_27 = arith.constant 0 : index
    %74 = vector.load %arg3[%c18, %c0_27] : memref<32x128xf32, #tpu.memory_space<vmem>>, vector<1x32xf32>
    %c19 = arith.constant 19 : index
    %c0_28 = arith.constant 0 : index
    %75 = vector.load %arg3[%c19, %c0_28] : memref<32x128xf32, #tpu.memory_space<vmem>>, vector<1x32xf32>
    %cst_29 = arith.constant dense<0.000000e+00> : vector<16xf32>
    %76 = vector.multi_reduction <add>, %73, %cst_29 [1] : vector<16x32xf32> to vector<16xf32>
    %77 = vector.shape_cast %76 : vector<16xf32> to vector<16x1xf32>
    %cst_30 = arith.constant 3.200000e+01 : f32
    %78 = vector.broadcast %cst_30 : f32 to vector<16x1xf32>
    %79 = arith.divf %77, %78 : vector<16x1xf32>
    %80 = vector.broadcast %79 : vector<16x1xf32> to vector<16x32xf32>
    %81 = arith.subf %73, %80 : vector<16x32xf32>
    %82 = arith.mulf %81, %81 : vector<16x32xf32>
    %cst_31 = arith.constant dense<0.000000e+00> : vector<16xf32>
    %83 = vector.multi_reduction <add>, %82, %cst_31 [1] : vector<16x32xf32> to vector<16xf32>
    %84 = vector.shape_cast %83 : vector<16xf32> to vector<16x1xf32>
    %cst_32 = arith.constant 3.200000e+01 : f32
    %85 = vector.broadcast %cst_32 : f32 to vector<16x1xf32>
    %86 = arith.divf %84, %85 : vector<16x1xf32>
    %87 = vector.broadcast %79 : vector<16x1xf32> to vector<16x32xf32>
    %88 = arith.subf %73, %87 : vector<16x32xf32>
    %cst_33 = arith.constant 9.99999996E-13 : f32
    %89 = vector.broadcast %cst_33 : f32 to vector<16x1xf32>
    %90 = arith.addf %86, %89 : vector<16x1xf32>
    %91 = math.rsqrt %90 : vector<16x1xf32>
    %92 = vector.broadcast %91 : vector<16x1xf32> to vector<16x32xf32>
    %93 = arith.mulf %88, %92 : vector<16x32xf32>
    %94 = vector.broadcast %74 : vector<1x32xf32> to vector<16x32xf32>
    %95 = arith.mulf %93, %94 : vector<16x32xf32>
    %96 = vector.broadcast %75 : vector<1x32xf32> to vector<16x32xf32>
    %97 = arith.addf %95, %96 : vector<16x32xf32>
    %c0_34 = arith.constant 0 : index
    %c0_35 = arith.constant 0 : index
    %c0_36 = arith.constant 0 : index
    %98 = vector.load %arg6[%c0_34, %c0_35, %c0_36] : memref<2x32x64xf32, #tpu.memory_space<vmem>>, vector<1x32x64xf32>
    %99 = vector.shape_cast %98 : vector<1x32x64xf32> to vector<32x64xf32>
    %cst_37 = arith.constant dense<0.000000e+00> : vector<16x64xf32>
    %100 = tpu.matmul %97, %99, %cst_37 {dimension_numbers = #tpu.dot_dimension_numbers<[1], [0], [0], [1], [0, 0, 1, 1], [], []>} : vector<16x32xf32>, vector<32x64xf32>, vector<16x64xf32> -> vector<16x64xf32>
    %c20 = arith.constant 20 : index
    %c0_38 = arith.constant 0 : index
    %101 = vector.load %arg3[%c20, %c0_38] : memref<32x128xf32, #tpu.memory_space<vmem>>, vector<1x64xf32>
    %102 = vector.broadcast %101 : vector<1x64xf32> to vector<16x64xf32>
    %103 = arith.addf %100, %102 : vector<16x64xf32>
    %cst_39 = arith.constant 5.000000e-01 : f32
    %104 = vector.broadcast %cst_39 : f32 to vector<16x64xf32>
    %105 = arith.mulf %104, %103 : vector<16x64xf32>
    %cst_40 = arith.constant 4.471500e-02 : f32
    %106 = vector.broadcast %cst_40 : f32 to vector<16x64xf32>
    %107 = arith.mulf %106, %103 : vector<16x64xf32>
    %108 = arith.mulf %107, %103 : vector<16x64xf32>
    %109 = arith.mulf %108, %103 : vector<16x64xf32>
    %110 = arith.addf %103, %109 : vector<16x64xf32>
    %cst_41 = arith.constant 0.797884583 : f32
    %111 = vector.broadcast %cst_41 : f32 to vector<16x64xf32>
    %112 = arith.mulf %111, %110 : vector<16x64xf32>
    %113 = math.tanh %112 : vector<16x64xf32>
    %cst_42 = arith.constant 1.000000e+00 : f32
    %114 = vector.broadcast %cst_42 : f32 to vector<16x64xf32>
    %115 = arith.addf %114, %113 : vector<16x64xf32>
    %116 = arith.mulf %105, %115 : vector<16x64xf32>
    %c0_43 = arith.constant 0 : index
    %c0_44 = arith.constant 0 : index
    %c0_45 = arith.constant 0 : index
    %117 = vector.load %arg7[%c0_43, %c0_44, %c0_45] : memref<2x64x32xf32, #tpu.memory_space<vmem>>, vector<1x64x32xf32>
    %118 = vector.shape_cast %117 : vector<1x64x32xf32> to vector<64x32xf32>
    %cst_46 = arith.constant dense<0.000000e+00> : vector<16x32xf32>
    %119 = tpu.matmul %116, %118, %cst_46 {dimension_numbers = #tpu.dot_dimension_numbers<[1], [0], [0], [1], [0, 0, 1, 1], [], []>} : vector<16x64xf32>, vector<64x32xf32>, vector<16x32xf32> -> vector<16x32xf32>
    %c21 = arith.constant 21 : index
    %c0_47 = arith.constant 0 : index
    %120 = vector.load %arg3[%c21, %c0_47] : memref<32x128xf32, #tpu.memory_space<vmem>>, vector<1x32xf32>
    %121 = vector.broadcast %120 : vector<1x32xf32> to vector<16x32xf32>
    %122 = arith.addf %119, %121 : vector<16x32xf32>
    %123 = arith.addf %97, %122 : vector<16x32xf32>
    %c22 = arith.constant 22 : index
    %c0_48 = arith.constant 0 : index
    %124 = vector.load %arg3[%c22, %c0_48] : memref<32x128xf32, #tpu.memory_space<vmem>>, vector<1x32xf32>
    %c23 = arith.constant 23 : index
    %c0_49 = arith.constant 0 : index
    %125 = vector.load %arg3[%c23, %c0_49] : memref<32x128xf32, #tpu.memory_space<vmem>>, vector<1x32xf32>
    %cst_50 = arith.constant dense<0.000000e+00> : vector<16xf32>
    %126 = vector.multi_reduction <add>, %123, %cst_50 [1] : vector<16x32xf32> to vector<16xf32>
    %127 = vector.shape_cast %126 : vector<16xf32> to vector<16x1xf32>
    %cst_51 = arith.constant 3.200000e+01 : f32
    %128 = vector.broadcast %cst_51 : f32 to vector<16x1xf32>
    %129 = arith.divf %127, %128 : vector<16x1xf32>
    %130 = vector.broadcast %129 : vector<16x1xf32> to vector<16x32xf32>
    %131 = arith.subf %123, %130 : vector<16x32xf32>
    %132 = arith.mulf %131, %131 : vector<16x32xf32>
    %cst_52 = arith.constant dense<0.000000e+00> : vector<16xf32>
    %133 = vector.multi_reduction <add>, %132, %cst_52 [1] : vector<16x32xf32> to vector<16xf32>
    %134 = vector.shape_cast %133 : vector<16xf32> to vector<16x1xf32>
    %cst_53 = arith.constant 3.200000e+01 : f32
    %135 = vector.broadcast %cst_53 : f32 to vector<16x1xf32>
    %136 = arith.divf %134, %135 : vector<16x1xf32>
    %137 = vector.broadcast %129 : vector<16x1xf32> to vector<16x32xf32>
    %138 = arith.subf %123, %137 : vector<16x32xf32>
    %cst_54 = arith.constant 9.99999996E-13 : f32
    %139 = vector.broadcast %cst_54 : f32 to vector<16x1xf32>
    %140 = arith.addf %136, %139 : vector<16x1xf32>
    %141 = math.rsqrt %140 : vector<16x1xf32>
    %142 = vector.broadcast %141 : vector<16x1xf32> to vector<16x32xf32>
    %143 = arith.mulf %138, %142 : vector<16x32xf32>
    %144 = vector.broadcast %124 : vector<1x32xf32> to vector<16x32xf32>
    %145 = arith.mulf %143, %144 : vector<16x32xf32>
    %146 = vector.broadcast %125 : vector<1x32xf32> to vector<16x32xf32>
    %147 = arith.addf %145, %146 : vector<16x32xf32>
    %c1_55 = arith.constant 1 : index
    %c0_56 = arith.constant 0 : index
    %c0_57 = arith.constant 0 : index
    %148 = vector.load %arg4[%c1_55, %c0_56, %c0_57] : memref<2x32x96xf32, #tpu.memory_space<vmem>>, vector<1x32x96xf32>
    %149 = vector.shape_cast %148 : vector<1x32x96xf32> to vector<32x96xf32>
    %cst_58 = arith.constant dense<0.000000e+00> : vector<16x96xf32>
    %150 = tpu.matmul %147, %149, %cst_58 {dimension_numbers = #tpu.dot_dimension_numbers<[1], [0], [0], [1], [0, 0, 1, 1], [], []>} : vector<16x32xf32>, vector<32x96xf32>, vector<16x96xf32> -> vector<16x96xf32>
    %c24 = arith.constant 24 : index
    %c0_59 = arith.constant 0 : index
    %151 = vector.load %arg3[%c24, %c0_59] : memref<32x128xf32, #tpu.memory_space<vmem>>, vector<1x96xf32>
    %152 = vector.broadcast %151 : vector<1x96xf32> to vector<16x96xf32>
    %153 = arith.addf %150, %152 : vector<16x96xf32>
    %154 = vector.extract_strided_slice %153 {offsets = [0, 0], sizes = [16, 48], strides = [1, 1]} : vector<16x96xf32> to vector<16x48xf32>
    %155 = vector.extract_strided_slice %153 {offsets = [0, 48], sizes = [16, 48], strides = [1, 1]} : vector<16x96xf32> to vector<16x48xf32>
    %156 = tpu.concatenate %154, %155 in 0 : vector<16x48xf32>, vector<16x48xf32> -> vector<32x48xf32>
    %157 = vector.extract_strided_slice %156 {offsets = [0, 0], sizes = [32, 16], strides = [1, 1]} : vector<32x48xf32> to vector<32x16xf32>
    %158 = vector.shape_cast %157 : vector<32x16xf32> to vector<4x8x16xf32>
    %159 = vector.extract_strided_slice %156 {offsets = [0, 16], sizes = [32, 16], strides = [1, 1]} : vector<32x48xf32> to vector<32x16xf32>
    %160 = vector.shape_cast %159 : vector<32x16xf32> to vector<4x8x16xf32>
    %161 = vector.extract_strided_slice %156 {offsets = [0, 32], sizes = [32, 16], strides = [1, 1]} : vector<32x48xf32> to vector<32x16xf32>
    %162 = vector.shape_cast %161 : vector<32x16xf32> to vector<4x8x16xf32>
    "tpu.trace_start"() <{level = 10 : i32, message = "bqd,bkd->bqk"}> : () -> ()
    %cst_60 = arith.constant dense<0.000000e+00> : vector<4x8x8xf32>
    %163 = tpu.matmul %158, %160, %cst_60 {dimension_numbers = #tpu.dot_dimension_numbers<[2], [2], [1], [1], [0, 0, 0, 1, 1, 1], [0], [0]>} : vector<4x8x16xf32>, vector<4x8x16xf32>, vector<4x8x8xf32> -> vector<4x8x8xf32>
    "tpu.trace_stop"() : () -> ()
    %cst_61 = arith.constant 2.500000e-01 : f32
    %164 = vector.broadcast %cst_61 : f32 to vector<4x8x8xf32>
    %165 = arith.mulf %163, %164 : vector<4x8x8xf32>
    %166 = vector.broadcast %31 : vector<4x1x8xf32> to vector<4x8x8xf32>
    %167 = arith.addf %165, %166 : vector<4x8x8xf32>
    %cst_62 = arith.constant dense<0xFF800000> : vector<4x8xf32>
    %168 = vector.multi_reduction <maximumf>, %167, %cst_62 [2] : vector<4x8x8xf32> to vector<4x8xf32>
    %169 = vector.shape_cast %168 : vector<4x8xf32> to vector<4x8x1xf32>
    %170 = vector.broadcast %169 : vector<4x8x1xf32> to vector<4x8x8xf32>
    %171 = arith.subf %167, %170 : vector<4x8x8xf32>
    %172 = math.exp %171 : vector<4x8x8xf32>
    %cst_63 = arith.constant dense<0.000000e+00> : vector<4x8xf32>
    %173 = vector.multi_reduction <add>, %172, %cst_63 [2] : vector<4x8x8xf32> to vector<4x8xf32>
    %174 = vector.shape_cast %173 : vector<4x8xf32> to vector<4x8x1xf32>
    %175 = tpu.reciprocal %174 {approx = true} : vector<4x8x1xf32> -> vector<4x8x1xf32>
    %176 = vector.broadcast %175 : vector<4x8x1xf32> to vector<4x8x8xf32>
    %177 = arith.mulf %172, %176 : vector<4x8x8xf32>
    "tpu.trace_start"() <{level = 10 : i32, message = "bqk,bkd->bqd"}> : () -> ()
    %cst_64 = arith.constant dense<0.000000e+00> : vector<4x8x16xf32>
    %178 = tpu.matmul %177, %162, %cst_64 {dimension_numbers = #tpu.dot_dimension_numbers<[2], [1], [1], [2], [0, 0, 0, 1, 1, 2], [0], [0]>} : vector<4x8x8xf32>, vector<4x8x16xf32>, vector<4x8x16xf32> -> vector<4x8x16xf32>
    "tpu.trace_stop"() : () -> ()
    %179 = vector.shape_cast %178 : vector<4x8x16xf32> to vector<32x16xf32>
    %180 = vector.extract_strided_slice %179 {offsets = [0, 0], sizes = [16, 16], strides = [1, 1]} : vector<32x16xf32> to vector<16x16xf32>
    %181 = vector.extract_strided_slice %179 {offsets = [16, 0], sizes = [16, 16], strides = [1, 1]} : vector<32x16xf32> to vector<16x16xf32>
    %182 = tpu.concatenate %180, %181 in 1 : vector<16x16xf32>, vector<16x16xf32> -> vector<16x32xf32>
    %c1_65 = arith.constant 1 : index
    %c0_66 = arith.constant 0 : index
    %c0_67 = arith.constant 0 : index
    %183 = vector.load %arg5[%c1_65, %c0_66, %c0_67] : memref<2x32x32xf32, #tpu.memory_space<vmem>>, vector<1x32x32xf32>
    %184 = vector.shape_cast %183 : vector<1x32x32xf32> to vector<32x32xf32>
    %cst_68 = arith.constant dense<0.000000e+00> : vector<16x32xf32>
    %185 = tpu.matmul %182, %184, %cst_68 {dimension_numbers = #tpu.dot_dimension_numbers<[1], [0], [0], [1], [0, 0, 1, 1], [], []>} : vector<16x32xf32>, vector<32x32xf32>, vector<16x32xf32> -> vector<16x32xf32>
    %c25 = arith.constant 25 : index
    %c0_69 = arith.constant 0 : index
    %186 = vector.load %arg3[%c25, %c0_69] : memref<32x128xf32, #tpu.memory_space<vmem>>, vector<1x32xf32>
    %187 = vector.broadcast %186 : vector<1x32xf32> to vector<16x32xf32>
    %188 = arith.addf %185, %187 : vector<16x32xf32>
    %189 = arith.addf %147, %188 : vector<16x32xf32>
    %c26 = arith.constant 26 : index
    %c0_70 = arith.constant 0 : index
    %190 = vector.load %arg3[%c26, %c0_70] : memref<32x128xf32, #tpu.memory_space<vmem>>, vector<1x32xf32>
    %c27 = arith.constant 27 : index
    %c0_71 = arith.constant 0 : index
    %191 = vector.load %arg3[%c27, %c0_71] : memref<32x128xf32, #tpu.memory_space<vmem>>, vector<1x32xf32>
    %cst_72 = arith.constant dense<0.000000e+00> : vector<16xf32>
    %192 = vector.multi_reduction <add>, %189, %cst_72 [1] : vector<16x32xf32> to vector<16xf32>
    %193 = vector.shape_cast %192 : vector<16xf32> to vector<16x1xf32>
    %cst_73 = arith.constant 3.200000e+01 : f32
    %194 = vector.broadcast %cst_73 : f32 to vector<16x1xf32>
    %195 = arith.divf %193, %194 : vector<16x1xf32>
    %196 = vector.broadcast %195 : vector<16x1xf32> to vector<16x32xf32>
    %197 = arith.subf %189, %196 : vector<16x32xf32>
    %198 = arith.mulf %197, %197 : vector<16x32xf32>
    %cst_74 = arith.constant dense<0.000000e+00> : vector<16xf32>
    %199 = vector.multi_reduction <add>, %198, %cst_74 [1] : vector<16x32xf32> to vector<16xf32>
    %200 = vector.shape_cast %199 : vector<16xf32> to vector<16x1xf32>
    %cst_75 = arith.constant 3.200000e+01 : f32
    %201 = vector.broadcast %cst_75 : f32 to vector<16x1xf32>
    %202 = arith.divf %200, %201 : vector<16x1xf32>
    %203 = vector.broadcast %195 : vector<16x1xf32> to vector<16x32xf32>
    %204 = arith.subf %189, %203 : vector<16x32xf32>
    %cst_76 = arith.constant 9.99999996E-13 : f32
    %205 = vector.broadcast %cst_76 : f32 to vector<16x1xf32>
    %206 = arith.addf %202, %205 : vector<16x1xf32>
    %207 = math.rsqrt %206 : vector<16x1xf32>
    %208 = vector.broadcast %207 : vector<16x1xf32> to vector<16x32xf32>
    %209 = arith.mulf %204, %208 : vector<16x32xf32>
    %210 = vector.broadcast %190 : vector<1x32xf32> to vector<16x32xf32>
    %211 = arith.mulf %209, %210 : vector<16x32xf32>
    %212 = vector.broadcast %191 : vector<1x32xf32> to vector<16x32xf32>
    %213 = arith.addf %211, %212 : vector<16x32xf32>
    %c1_77 = arith.constant 1 : index
    %c0_78 = arith.constant 0 : index
    %c0_79 = arith.constant 0 : index
    %214 = vector.load %arg6[%c1_77, %c0_78, %c0_79] : memref<2x32x64xf32, #tpu.memory_space<vmem>>, vector<1x32x64xf32>
    %215 = vector.shape_cast %214 : vector<1x32x64xf32> to vector<32x64xf32>
    %cst_80 = arith.constant dense<0.000000e+00> : vector<16x64xf32>
    %216 = tpu.matmul %213, %215, %cst_80 {dimension_numbers = #tpu.dot_dimension_numbers<[1], [0], [0], [1], [0, 0, 1, 1], [], []>} : vector<16x32xf32>, vector<32x64xf32>, vector<16x64xf32> -> vector<16x64xf32>
    %c28 = arith.constant 28 : index
    %c0_81 = arith.constant 0 : index
    %217 = vector.load %arg3[%c28, %c0_81] : memref<32x128xf32, #tpu.memory_space<vmem>>, vector<1x64xf32>
    %218 = vector.broadcast %217 : vector<1x64xf32> to vector<16x64xf32>
    %219 = arith.addf %216, %218 : vector<16x64xf32>
    %cst_82 = arith.constant 5.000000e-01 : f32
    %220 = vector.broadcast %cst_82 : f32 to vector<16x64xf32>
    %221 = arith.mulf %220, %219 : vector<16x64xf32>
    %cst_83 = arith.constant 4.471500e-02 : f32
    %222 = vector.broadcast %cst_83 : f32 to vector<16x64xf32>
    %223 = arith.mulf %222, %219 : vector<16x64xf32>
    %224 = arith.mulf %223, %219 : vector<16x64xf32>
    %225 = arith.mulf %224, %219 : vector<16x64xf32>
    %226 = arith.addf %219, %225 : vector<16x64xf32>
    %cst_84 = arith.constant 0.797884583 : f32
    %227 = vector.broadcast %cst_84 : f32 to vector<16x64xf32>
    %228 = arith.mulf %227, %226 : vector<16x64xf32>
    %229 = math.tanh %228 : vector<16x64xf32>
    %cst_85 = arith.constant 1.000000e+00 : f32
    %230 = vector.broadcast %cst_85 : f32 to vector<16x64xf32>
    %231 = arith.addf %230, %229 : vector<16x64xf32>
    %232 = arith.mulf %221, %231 : vector<16x64xf32>
    %c1_86 = arith.constant 1 : index
    %c0_87 = arith.constant 0 : index
    %c0_88 = arith.constant 0 : index
    %233 = vector.load %arg7[%c1_86, %c0_87, %c0_88] : memref<2x64x32xf32, #tpu.memory_space<vmem>>, vector<1x64x32xf32>
    %234 = vector.shape_cast %233 : vector<1x64x32xf32> to vector<64x32xf32>
    %cst_89 = arith.constant dense<0.000000e+00> : vector<16x32xf32>
    %235 = tpu.matmul %232, %234, %cst_89 {dimension_numbers = #tpu.dot_dimension_numbers<[1], [0], [0], [1], [0, 0, 1, 1], [], []>} : vector<16x64xf32>, vector<64x32xf32>, vector<16x32xf32> -> vector<16x32xf32>
    %c29 = arith.constant 29 : index
    %c0_90 = arith.constant 0 : index
    %236 = vector.load %arg3[%c29, %c0_90] : memref<32x128xf32, #tpu.memory_space<vmem>>, vector<1x32xf32>
    %237 = vector.broadcast %236 : vector<1x32xf32> to vector<16x32xf32>
    %238 = arith.addf %235, %237 : vector<16x32xf32>
    %239 = arith.addf %213, %238 : vector<16x32xf32>
    %c30 = arith.constant 30 : index
    %c0_91 = arith.constant 0 : index
    %240 = vector.load %arg3[%c30, %c0_91] : memref<32x128xf32, #tpu.memory_space<vmem>>, vector<1x32xf32>
    %c31 = arith.constant 31 : index
    %c0_92 = arith.constant 0 : index
    %241 = vector.load %arg3[%c31, %c0_92] : memref<32x128xf32, #tpu.memory_space<vmem>>, vector<1x32xf32>
    %cst_93 = arith.constant dense<0.000000e+00> : vector<16xf32>
    %242 = vector.multi_reduction <add>, %239, %cst_93 [1] : vector<16x32xf32> to vector<16xf32>
    %243 = vector.shape_cast %242 : vector<16xf32> to vector<16x1xf32>
    %cst_94 = arith.constant 3.200000e+01 : f32
    %244 = vector.broadcast %cst_94 : f32 to vector<16x1xf32>
    %245 = arith.divf %243, %244 : vector<16x1xf32>
    %246 = vector.broadcast %245 : vector<16x1xf32> to vector<16x32xf32>
    %247 = arith.subf %239, %246 : vector<16x32xf32>
    %248 = arith.mulf %247, %247 : vector<16x32xf32>
    %cst_95 = arith.constant dense<0.000000e+00> : vector<16xf32>
    %249 = vector.multi_reduction <add>, %248, %cst_95 [1] : vector<16x32xf32> to vector<16xf32>
    %250 = vector.shape_cast %249 : vector<16xf32> to vector<16x1xf32>
    %cst_96 = arith.constant 3.200000e+01 : f32
    %251 = vector.broadcast %cst_96 : f32 to vector<16x1xf32>
    %252 = arith.divf %250, %251 : vector<16x1xf32>
    %253 = vector.broadcast %245 : vector<16x1xf32> to vector<16x32xf32>
    %254 = arith.subf %239, %253 : vector<16x32xf32>
    %cst_97 = arith.constant 9.99999996E-13 : f32
    %255 = vector.broadcast %cst_97 : f32 to vector<16x1xf32>
    %256 = arith.addf %252, %255 : vector<16x1xf32>
    %257 = math.rsqrt %256 : vector<16x1xf32>
    %258 = vector.broadcast %257 : vector<16x1xf32> to vector<16x32xf32>
    %259 = arith.mulf %254, %258 : vector<16x32xf32>
    %260 = vector.broadcast %240 : vector<1x32xf32> to vector<16x32xf32>
    %261 = arith.mulf %259, %260 : vector<16x32xf32>
    %262 = vector.broadcast %241 : vector<1x32xf32> to vector<16x32xf32>
    %263 = arith.addf %261, %262 : vector<16x32xf32>
    %c0_98 = arith.constant 0 : index
    %c0_99 = arith.constant 0 : index
    %264 = vector.load %arg8[%c0_98, %c0_99] : memref<32x128xf32, #tpu.memory_space<vmem>>, vector<32x128xf32>
    %cst_100 = arith.constant dense<0.000000e+00> : vector<16x128xf32>
    %265 = tpu.matmul %263, %264, %cst_100 {dimension_numbers = #tpu.dot_dimension_numbers<[1], [0], [0], [1], [0, 0, 1, 1], [], []>} : vector<16x32xf32>, vector<32x128xf32>, vector<16x128xf32> -> vector<16x128xf32>
    %c2 = arith.constant 2 : index
    %c0_101 = arith.constant 0 : index
    %266 = vector.load %arg3[%c2, %c0_101] : memref<32x128xf32, #tpu.memory_space<vmem>>, vector<1x128xf32>
    %267 = vector.broadcast %266 : vector<1x128xf32> to vector<16x128xf32>
    %268 = arith.addf %265, %267 : vector<16x128xf32>
    %269 = vector.extract_strided_slice %268 {offsets = [0, 0], sizes = [16, 8], strides = [1, 1]} : vector<16x128xf32> to vector<16x8xf32>
    %270 = vector.shape_cast %269 : vector<16x8xf32> to vector<2x8x8xf32>
    %c0_102 = arith.constant 0 : index
    %c0_103 = arith.constant 0 : index
    %c0_104 = arith.constant 0 : index
    %271 = vector.load %arg2[%c0_102, %c0_103, %c0_104] : memref<2x8x1xi32, #tpu.memory_space<vmem>>, vector<2x8x1xi32>
    %272 = tpu.iota {dimensions = array<i32: 2>} : vector<2x8x8xi32>
    %273 = vector.broadcast %271 : vector<2x8x1xi32> to vector<2x8x8xi32>
    %274 = arith.cmpi eq, %273, %272 : vector<2x8x8xi32>
    %275 = arith.extui %274 : vector<2x8x8xi1> to vector<2x8x8xi32>
    %276 = arith.sitofp %275 : vector<2x8x8xi32> to vector<2x8x8xf32>
    %c8 = arith.constant 8 : index
    %c0_105 = arith.constant 0 : index
    %277 = vector.load %arg3[%c8, %c0_105] : memref<32x128xf32, #tpu.memory_space<vmem>>, vector<8x8xf32>
    %c3 = arith.constant 3 : index
    %c0_106 = arith.constant 0 : index
    %278 = vector.load %arg3[%c3, %c0_106] : memref<32x128xf32, #tpu.memory_space<vmem>>, vector<1x8xf32>
    %c4 = arith.constant 4 : index
    %c0_107 = arith.constant 0 : index
    %279 = vector.load %arg3[%c4, %c0_107] : memref<32x128xf32, #tpu.memory_space<vmem>>, vector<1x8xf32>
    %280 = arith.mulf %270, %276 : vector<2x8x8xf32>
    %cst_108 = arith.constant dense<0.000000e+00> : vector<2x8xf32>
    %281 = vector.multi_reduction <add>, %280, %cst_108 [2] : vector<2x8x8xf32> to vector<2x8xf32>
    %282 = vector.shape_cast %276 : vector<2x8x8xf32> to vector<16x8xf32>
    %cst_109 = arith.constant dense<0.000000e+00> : vector<16x8xf32>
    %283 = tpu.matmul %282, %277, %cst_109 {dimension_numbers = #tpu.dot_dimension_numbers<[1], [0], [0], [1], [0, 0, 1, 1], [], []>} : vector<16x8xf32>, vector<8x8xf32>, vector<16x8xf32> -> vector<16x8xf32>
    %284 = vector.shape_cast %283 : vector<16x8xf32> to vector<2x8x8xf32>
    %285 = vector.extract_strided_slice %284 {offsets = [0, 0, 0], sizes = [2, 7, 8], strides = [1, 1, 1]} : vector<2x8x8xf32> to vector<2x7x8xf32>
    %286 = vector.extract_strided_slice %276 {offsets = [0, 1, 0], sizes = [2, 7, 8], strides = [1, 1, 1]} : vector<2x8x8xf32> to vector<2x7x8xf32>
    %287 = arith.mulf %285, %286 : vector<2x7x8xf32>
    %cst_110 = arith.constant dense<0.000000e+00> : vector<2x7xf32>
    %288 = vector.multi_reduction <add>, %287, %cst_110 [2] : vector<2x7x8xf32> to vector<2x7xf32>
    %289 = vector.extract_strided_slice %25 {offsets = [0, 1], sizes = [2, 7], strides = [1, 1]} : vector<2x8xf32> to vector<2x7xf32>
    %290 = vector.extract_strided_slice %276 {offsets = [0, 0, 0], sizes = [2, 1, 8], strides = [1, 1, 1]} : vector<2x8x8xf32> to vector<2x1x8xf32>
    %291 = vector.shape_cast %290 : vector<2x1x8xf32> to vector<2x8xf32>
    %292 = vector.broadcast %278 : vector<1x8xf32> to vector<2x8xf32>
    %293 = arith.mulf %292, %291 : vector<2x8xf32>
    %cst_111 = arith.constant dense<0.000000e+00> : vector<2xf32>
    %294 = vector.multi_reduction <add>, %293, %cst_111 [1] : vector<2x8xf32> to vector<2xf32>
    %295 = vector.shape_cast %294 : vector<2xf32> to vector<2x1xf32>
    %296 = vector.extract_strided_slice %281 {offsets = [0, 0], sizes = [2, 1], strides = [1, 1]} : vector<2x8xf32> to vector<2x1xf32>
    %297 = arith.addf %295, %296 : vector<2x1xf32>
    %298 = vector.extract_strided_slice %281 {offsets = [0, 1], sizes = [2, 7], strides = [1, 1]} : vector<2x8xf32> to vector<2x7xf32>
    %299 = arith.addf %298, %288 : vector<2x7xf32>
    %300 = arith.mulf %289, %299 : vector<2x7xf32>
    %cst_112 = arith.constant dense<0.000000e+00> : vector<2xf32>
    %301 = vector.multi_reduction <add>, %300, %cst_112 [1] : vector<2x7xf32> to vector<2xf32>
    %302 = vector.shape_cast %301 : vector<2xf32> to vector<2x1xf32>
    %303 = arith.addf %297, %302 : vector<2x1xf32>
    %304 = vector.extract_strided_slice %25 {offsets = [0, 1], sizes = [2, 7], strides = [1, 1]} : vector<2x8xf32> to vector<2x7xf32>
    %cst_113 = arith.constant 0.000000e+00 : f32
    %305 = vector.broadcast %cst_113 : f32 to vector<2x1xf32>
    %306 = tpu.concatenate %304, %305 in 1 : vector<2x7xf32>, vector<2x1xf32> -> vector<2x8xf32>
    %cst_114 = arith.constant 1.000000e+00 : f32
    %307 = vector.broadcast %cst_114 : f32 to vector<2x8xf32>
    %308 = arith.subf %307, %306 : vector<2x8xf32>
    %309 = arith.mulf %25, %308 : vector<2x8xf32>
    %310 = vector.shape_cast %279 : vector<1x8xf32> to vector<1x1x8xf32>
    %311 = vector.broadcast %310 : vector<1x1x8xf32> to vector<2x8x8xf32>
    %312 = arith.mulf %276, %311 : vector<2x8x8xf32>
    %cst_115 = arith.constant dense<0.000000e+00> : vector<2x8xf32>
    %313 = vector.multi_reduction <add>, %312, %cst_115 [2] : vector<2x8x8xf32> to vector<2x8xf32>
    %314 = arith.mulf %309, %313 : vector<2x8xf32>
    %cst_116 = arith.constant dense<0.000000e+00> : vector<2xf32>
    %315 = vector.multi_reduction <add>, %314, %cst_116 [1] : vector<2x8xf32> to vector<2xf32>
    %316 = vector.shape_cast %315 : vector<2xf32> to vector<2x1xf32>
    %317 = arith.addf %303, %316 : vector<2x1xf32>
    %318 = vector.extract_strided_slice %270 {offsets = [0, 0, 0], sizes = [2, 1, 8], strides = [1, 1, 1]} : vector<2x8x8xf32> to vector<2x1x8xf32>
    %319 = vector.shape_cast %318 : vector<2x1x8xf32> to vector<2x8xf32>
    %320 = vector.broadcast %278 : vector<1x8xf32> to vector<2x8xf32>
    %321 = arith.addf %320, %319 : vector<2x8xf32>
    %322 = vector.shape_cast %321 : vector<2x8xf32> to vector<2x8x1xf32>
    %323 = vector.shape_cast %277 : vector<8x8xf32> to vector<1x8x8xf32>
    %324 = vector.broadcast %322 : vector<2x8x1xf32> to vector<2x8x8xf32>
    %325 = vector.broadcast %323 : vector<1x8x8xf32> to vector<2x8x8xf32>
    %326 = arith.addf %324, %325 : vector<2x8x8xf32>
    %327 = vector.extract_strided_slice %270 {offsets = [0, 1, 0], sizes = [2, 1, 8], strides = [1, 1, 1]} : vector<2x8x8xf32> to vector<2x1x8xf32>
    %328 = vector.shape_cast %327 : vector<2x1x8xf32> to vector<2x8xf32>
    %329 = vector.shape_cast %328 : vector<2x8xf32> to vector<2x1x8xf32>
    %330 = vector.broadcast %329 : vector<2x1x8xf32> to vector<2x8x8xf32>
    %331 = arith.addf %326, %330 : vector<2x8x8xf32>
    %cst_117 = arith.constant dense<0xFF800000> : vector<2x8xf32>
    %332 = vector.multi_reduction <maximumf>, %331, %cst_117 [1] : vector<2x8x8xf32> to vector<2x8xf32>
    %333 = vector.shape_cast %332 : vector<2x8xf32> to vector<2x1x8xf32>
    %334 = vector.broadcast %333 : vector<2x1x8xf32> to vector<2x8x8xf32>
    %335 = arith.subf %331, %334 : vector<2x8x8xf32>
    %336 = math.exp %335 : vector<2x8x8xf32>
    %cst_118 = arith.constant dense<0.000000e+00> : vector<2x8xf32>
    %337 = vector.multi_reduction <add>, %336, %cst_118 [1] : vector<2x8x8xf32> to vector<2x8xf32>
    %338 = vector.shape_cast %337 : vector<2x8xf32> to vector<2x1x8xf32>
    %339 = math.log %338 : vector<2x1x8xf32>
    %340 = arith.addf %333, %339 : vector<2x1x8xf32>
    %341 = vector.shape_cast %340 : vector<2x1x8xf32> to vector<2x8xf32>
    %342 = vector.extract_strided_slice %25 {offsets = [0, 1], sizes = [2, 1], strides = [1, 1]} : vector<2x8xf32> to vector<2x1xf32>
    %cst_119 = arith.constant 0.000000e+00 : f32
    %343 = vector.broadcast %cst_119 : f32 to vector<2x1xf32>
    %344 = arith.cmpf ogt, %342, %343 : vector<2x1xf32>
    %345 = vector.shape_cast %344 : vector<2x1xi1> to vector<2x1xi1>
    %346 = vector.broadcast %345 : vector<2x1xi1> to vector<2x8xi1>
    %347 = arith.select %346, %341, %321 : vector<2x8xi1>, vector<2x8xf32>
    %348 = vector.shape_cast %347 : vector<2x8xf32> to vector<2x8x1xf32>
    %349 = vector.shape_cast %277 : vector<8x8xf32> to vector<1x8x8xf32>
    %350 = vector.broadcast %348 : vector<2x8x1xf32> to vector<2x8x8xf32>
    %351 = vector.broadcast %349 : vector<1x8x8xf32> to vector<2x8x8xf32>
    %352 = arith.addf %350, %351 : vector<2x8x8xf32>
    %353 = vector.extract_strided_slice %270 {offsets = [0, 2, 0], sizes = [2, 1, 8], strides = [1, 1, 1]} : vector<2x8x8xf32> to vector<2x1x8xf32>
    %354 = vector.shape_cast %353 : vector<2x1x8xf32> to vector<2x8xf32>
    %355 = vector.shape_cast %354 : vector<2x8xf32> to vector<2x1x8xf32>
    %356 = vector.broadcast %355 : vector<2x1x8xf32> to vector<2x8x8xf32>
    %357 = arith.addf %352, %356 : vector<2x8x8xf32>
    %cst_120 = arith.constant dense<0xFF800000> : vector<2x8xf32>
    %358 = vector.multi_reduction <maximumf>, %357, %cst_120 [1] : vector<2x8x8xf32> to vector<2x8xf32>
    %359 = vector.shape_cast %358 : vector<2x8xf32> to vector<2x1x8xf32>
    %360 = vector.broadcast %359 : vector<2x1x8xf32> to vector<2x8x8xf32>
    %361 = arith.subf %357, %360 : vector<2x8x8xf32>
    %362 = math.exp %361 : vector<2x8x8xf32>
    %cst_121 = arith.constant dense<0.000000e+00> : vector<2x8xf32>
    %363 = vector.multi_reduction <add>, %362, %cst_121 [1] : vector<2x8x8xf32> to vector<2x8xf32>
    %364 = vector.shape_cast %363 : vector<2x8xf32> to vector<2x1x8xf32>
    %365 = math.log %364 : vector<2x1x8xf32>
    %366 = arith.addf %359, %365 : vector<2x1x8xf32>
    %367 = vector.shape_cast %366 : vector<2x1x8xf32> to vector<2x8xf32>
    %368 = vector.extract_strided_slice %25 {offsets = [0, 2], sizes = [2, 1], strides = [1, 1]} : vector<2x8xf32> to vector<2x1xf32>
    %cst_122 = arith.constant 0.000000e+00 : f32
    %369 = vector.broadcast %cst_122 : f32 to vector<2x1xf32>
    %370 = arith.cmpf ogt, %368, %369 : vector<2x1xf32>
    %371 = vector.shape_cast %370 : vector<2x1xi1> to vector<2x1xi1>
    %372 = vector.broadcast %371 : vector<2x1xi1> to vector<2x8xi1>
    %373 = arith.select %372, %367, %347 : vector<2x8xi1>, vector<2x8xf32>
    %374 = vector.shape_cast %373 : vector<2x8xf32> to vector<2x8x1xf32>
    %375 = vector.shape_cast %277 : vector<8x8xf32> to vector<1x8x8xf32>
    %376 = vector.broadcast %374 : vector<2x8x1xf32> to vector<2x8x8xf32>
    %377 = vector.broadcast %375 : vector<1x8x8xf32> to vector<2x8x8xf32>
    %378 = arith.addf %376, %377 : vector<2x8x8xf32>
    %379 = vector.extract_strided_slice %270 {offsets = [0, 3, 0], sizes = [2, 1, 8], strides = [1, 1, 1]} : vector<2x8x8xf32> to vector<2x1x8xf32>
    %380 = vector.shape_cast %379 : vector<2x1x8xf32> to vector<2x8xf32>
    %381 = vector.shape_cast %380 : vector<2x8xf32> to vector<2x1x8xf32>
    %382 = vector.broadcast %381 : vector<2x1x8xf32> to vector<2x8x8xf32>
    %383 = arith.addf %378, %382 : vector<2x8x8xf32>
    %cst_123 = arith.constant dense<0xFF800000> : vector<2x8xf32>
    %384 = vector.multi_reduction <maximumf>, %383, %cst_123 [1] : vector<2x8x8xf32> to vector<2x8xf32>
    %385 = vector.shape_cast %384 : vector<2x8xf32> to vector<2x1x8xf32>
    %386 = vector.broadcast %385 : vector<2x1x8xf32> to vector<2x8x8xf32>
    %387 = arith.subf %383, %386 : vector<2x8x8xf32>
    %388 = math.exp %387 : vector<2x8x8xf32>
    %cst_124 = arith.constant dense<0.000000e+00> : vector<2x8xf32>
    %389 = vector.multi_reduction <add>, %388, %cst_124 [1] : vector<2x8x8xf32> to vector<2x8xf32>
    %390 = vector.shape_cast %389 : vector<2x8xf32> to vector<2x1x8xf32>
    %391 = math.log %390 : vector<2x1x8xf32>
    %392 = arith.addf %385, %391 : vector<2x1x8xf32>
    %393 = vector.shape_cast %392 : vector<2x1x8xf32> to vector<2x8xf32>
    %394 = vector.extract_strided_slice %25 {offsets = [0, 3], sizes = [2, 1], strides = [1, 1]} : vector<2x8xf32> to vector<2x1xf32>
    %cst_125 = arith.constant 0.000000e+00 : f32
    %395 = vector.broadcast %cst_125 : f32 to vector<2x1xf32>
    %396 = arith.cmpf ogt, %394, %395 : vector<2x1xf32>
    %397 = vector.shape_cast %396 : vector<2x1xi1> to vector<2x1xi1>
    %398 = vector.broadcast %397 : vector<2x1xi1> to vector<2x8xi1>
    %399 = arith.select %398, %393, %373 : vector<2x8xi1>, vector<2x8xf32>
    %400 = vector.shape_cast %399 : vector<2x8xf32> to vector<2x8x1xf32>
    %401 = vector.shape_cast %277 : vector<8x8xf32> to vector<1x8x8xf32>
    %402 = vector.broadcast %400 : vector<2x8x1xf32> to vector<2x8x8xf32>
    %403 = vector.broadcast %401 : vector<1x8x8xf32> to vector<2x8x8xf32>
    %404 = arith.addf %402, %403 : vector<2x8x8xf32>
    %405 = vector.extract_strided_slice %270 {offsets = [0, 4, 0], sizes = [2, 1, 8], strides = [1, 1, 1]} : vector<2x8x8xf32> to vector<2x1x8xf32>
    %406 = vector.shape_cast %405 : vector<2x1x8xf32> to vector<2x8xf32>
    %407 = vector.shape_cast %406 : vector<2x8xf32> to vector<2x1x8xf32>
    %408 = vector.broadcast %407 : vector<2x1x8xf32> to vector<2x8x8xf32>
    %409 = arith.addf %404, %408 : vector<2x8x8xf32>
    %cst_126 = arith.constant dense<0xFF800000> : vector<2x8xf32>
    %410 = vector.multi_reduction <maximumf>, %409, %cst_126 [1] : vector<2x8x8xf32> to vector<2x8xf32>
    %411 = vector.shape_cast %410 : vector<2x8xf32> to vector<2x1x8xf32>
    %412 = vector.broadcast %411 : vector<2x1x8xf32> to vector<2x8x8xf32>
    %413 = arith.subf %409, %412 : vector<2x8x8xf32>
    %414 = math.exp %413 : vector<2x8x8xf32>
    %cst_127 = arith.constant dense<0.000000e+00> : vector<2x8xf32>
    %415 = vector.multi_reduction <add>, %414, %cst_127 [1] : vector<2x8x8xf32> to vector<2x8xf32>
    %416 = vector.shape_cast %415 : vector<2x8xf32> to vector<2x1x8xf32>
    %417 = math.log %416 : vector<2x1x8xf32>
    %418 = arith.addf %411, %417 : vector<2x1x8xf32>
    %419 = vector.shape_cast %418 : vector<2x1x8xf32> to vector<2x8xf32>
    %420 = vector.extract_strided_slice %25 {offsets = [0, 4], sizes = [2, 1], strides = [1, 1]} : vector<2x8xf32> to vector<2x1xf32>
    %cst_128 = arith.constant 0.000000e+00 : f32
    %421 = vector.broadcast %cst_128 : f32 to vector<2x1xf32>
    %422 = arith.cmpf ogt, %420, %421 : vector<2x1xf32>
    %423 = vector.shape_cast %422 : vector<2x1xi1> to vector<2x1xi1>
    %424 = vector.broadcast %423 : vector<2x1xi1> to vector<2x8xi1>
    %425 = arith.select %424, %419, %399 : vector<2x8xi1>, vector<2x8xf32>
    %426 = vector.shape_cast %425 : vector<2x8xf32> to vector<2x8x1xf32>
    %427 = vector.shape_cast %277 : vector<8x8xf32> to vector<1x8x8xf32>
    %428 = vector.broadcast %426 : vector<2x8x1xf32> to vector<2x8x8xf32>
    %429 = vector.broadcast %427 : vector<1x8x8xf32> to vector<2x8x8xf32>
    %430 = arith.addf %428, %429 : vector<2x8x8xf32>
    %431 = vector.extract_strided_slice %270 {offsets = [0, 5, 0], sizes = [2, 1, 8], strides = [1, 1, 1]} : vector<2x8x8xf32> to vector<2x1x8xf32>
    %432 = vector.shape_cast %431 : vector<2x1x8xf32> to vector<2x8xf32>
    %433 = vector.shape_cast %432 : vector<2x8xf32> to vector<2x1x8xf32>
    %434 = vector.broadcast %433 : vector<2x1x8xf32> to vector<2x8x8xf32>
    %435 = arith.addf %430, %434 : vector<2x8x8xf32>
    %cst_129 = arith.constant dense<0xFF800000> : vector<2x8xf32>
    %436 = vector.multi_reduction <maximumf>, %435, %cst_129 [1] : vector<2x8x8xf32> to vector<2x8xf32>
    %437 = vector.shape_cast %436 : vector<2x8xf32> to vector<2x1x8xf32>
    %438 = vector.broadcast %437 : vector<2x1x8xf32> to vector<2x8x8xf32>
    %439 = arith.subf %435, %438 : vector<2x8x8xf32>
    %440 = math.exp %439 : vector<2x8x8xf32>
    %cst_130 = arith.constant dense<0.000000e+00> : vector<2x8xf32>
    %441 = vector.multi_reduction <add>, %440, %cst_130 [1] : vector<2x8x8xf32> to vector<2x8xf32>
    %442 = vector.shape_cast %441 : vector<2x8xf32> to vector<2x1x8xf32>
    %443 = math.log %442 : vector<2x1x8xf32>
    %444 = arith.addf %437, %443 : vector<2x1x8xf32>
    %445 = vector.shape_cast %444 : vector<2x1x8xf32> to vector<2x8xf32>
    %446 = vector.extract_strided_slice %25 {offsets = [0, 5], sizes = [2, 1], strides = [1, 1]} : vector<2x8xf32> to vector<2x1xf32>
    %cst_131 = arith.constant 0.000000e+00 : f32
    %447 = vector.broadcast %cst_131 : f32 to vector<2x1xf32>
    %448 = arith.cmpf ogt, %446, %447 : vector<2x1xf32>
    %449 = vector.shape_cast %448 : vector<2x1xi1> to vector<2x1xi1>
    %450 = vector.broadcast %449 : vector<2x1xi1> to vector<2x8xi1>
    %451 = arith.select %450, %445, %425 : vector<2x8xi1>, vector<2x8xf32>
    %452 = vector.shape_cast %451 : vector<2x8xf32> to vector<2x8x1xf32>
    %453 = vector.shape_cast %277 : vector<8x8xf32> to vector<1x8x8xf32>
    %454 = vector.broadcast %452 : vector<2x8x1xf32> to vector<2x8x8xf32>
    %455 = vector.broadcast %453 : vector<1x8x8xf32> to vector<2x8x8xf32>
    %456 = arith.addf %454, %455 : vector<2x8x8xf32>
    %457 = vector.extract_strided_slice %270 {offsets = [0, 6, 0], sizes = [2, 1, 8], strides = [1, 1, 1]} : vector<2x8x8xf32> to vector<2x1x8xf32>
    %458 = vector.shape_cast %457 : vector<2x1x8xf32> to vector<2x8xf32>
    %459 = vector.shape_cast %458 : vector<2x8xf32> to vector<2x1x8xf32>
    %460 = vector.broadcast %459 : vector<2x1x8xf32> to vector<2x8x8xf32>
    %461 = arith.addf %456, %460 : vector<2x8x8xf32>
    %cst_132 = arith.constant dense<0xFF800000> : vector<2x8xf32>
    %462 = vector.multi_reduction <maximumf>, %461, %cst_132 [1] : vector<2x8x8xf32> to vector<2x8xf32>
    %463 = vector.shape_cast %462 : vector<2x8xf32> to vector<2x1x8xf32>
    %464 = vector.broadcast %463 : vector<2x1x8xf32> to vector<2x8x8xf32>
    %465 = arith.subf %461, %464 : vector<2x8x8xf32>
    %466 = math.exp %465 : vector<2x8x8xf32>
    %cst_133 = arith.constant dense<0.000000e+00> : vector<2x8xf32>
    %467 = vector.multi_reduction <add>, %466, %cst_133 [1] : vector<2x8x8xf32> to vector<2x8xf32>
    %468 = vector.shape_cast %467 : vector<2x8xf32> to vector<2x1x8xf32>
    %469 = math.log %468 : vector<2x1x8xf32>
    %470 = arith.addf %463, %469 : vector<2x1x8xf32>
    %471 = vector.shape_cast %470 : vector<2x1x8xf32> to vector<2x8xf32>
    %472 = vector.extract_strided_slice %25 {offsets = [0, 6], sizes = [2, 1], strides = [1, 1]} : vector<2x8xf32> to vector<2x1xf32>
    %cst_134 = arith.constant 0.000000e+00 : f32
    %473 = vector.broadcast %cst_134 : f32 to vector<2x1xf32>
    %474 = arith.cmpf ogt, %472, %473 : vector<2x1xf32>
    %475 = vector.shape_cast %474 : vector<2x1xi1> to vector<2x1xi1>
    %476 = vector.broadcast %475 : vector<2x1xi1> to vector<2x8xi1>
    %477 = arith.select %476, %471, %451 : vector<2x8xi1>, vector<2x8xf32>
    %478 = vector.shape_cast %477 : vector<2x8xf32> to vector<2x8x1xf32>
    %479 = vector.shape_cast %277 : vector<8x8xf32> to vector<1x8x8xf32>
    %480 = vector.broadcast %478 : vector<2x8x1xf32> to vector<2x8x8xf32>
    %481 = vector.broadcast %479 : vector<1x8x8xf32> to vector<2x8x8xf32>
    %482 = arith.addf %480, %481 : vector<2x8x8xf32>
    %483 = vector.extract_strided_slice %270 {offsets = [0, 7, 0], sizes = [2, 1, 8], strides = [1, 1, 1]} : vector<2x8x8xf32> to vector<2x1x8xf32>
    %484 = vector.shape_cast %483 : vector<2x1x8xf32> to vector<2x8xf32>
    %485 = vector.shape_cast %484 : vector<2x8xf32> to vector<2x1x8xf32>
    %486 = vector.broadcast %485 : vector<2x1x8xf32> to vector<2x8x8xf32>
    %487 = arith.addf %482, %486 : vector<2x8x8xf32>
    %cst_135 = arith.constant dense<0xFF800000> : vector<2x8xf32>
    %488 = vector.multi_reduction <maximumf>, %487, %cst_135 [1] : vector<2x8x8xf32> to vector<2x8xf32>
    %489 = vector.shape_cast %488 : vector<2x8xf32> to vector<2x1x8xf32>
    %490 = vector.broadcast %489 : vector<2x1x8xf32> to vector<2x8x8xf32>
    %491 = arith.subf %487, %490 : vector<2x8x8xf32>
    %492 = math.exp %491 : vector<2x8x8xf32>
    %cst_136 = arith.constant dense<0.000000e+00> : vector<2x8xf32>
    %493 = vector.multi_reduction <add>, %492, %cst_136 [1] : vector<2x8x8xf32> to vector<2x8xf32>
    %494 = vector.shape_cast %493 : vector<2x8xf32> to vector<2x1x8xf32>
    %495 = math.log %494 : vector<2x1x8xf32>
    %496 = arith.addf %489, %495 : vector<2x1x8xf32>
    %497 = vector.shape_cast %496 : vector<2x1x8xf32> to vector<2x8xf32>
    %498 = vector.extract_strided_slice %25 {offsets = [0, 7], sizes = [2, 1], strides = [1, 1]} : vector<2x8xf32> to vector<2x1xf32>
    %cst_137 = arith.constant 0.000000e+00 : f32
    %499 = vector.broadcast %cst_137 : f32 to vector<2x1xf32>
    %500 = arith.cmpf ogt, %498, %499 : vector<2x1xf32>
    %501 = vector.shape_cast %500 : vector<2x1xi1> to vector<2x1xi1>
    %502 = vector.broadcast %501 : vector<2x1xi1> to vector<2x8xi1>
    %503 = arith.select %502, %497, %477 : vector<2x8xi1>, vector<2x8xf32>
    %504 = vector.broadcast %279 : vector<1x8xf32> to vector<2x8xf32>
    %505 = arith.addf %503, %504 : vector<2x8xf32>
    %cst_138 = arith.constant dense<0xFF800000> : vector<2xf32>
    %506 = vector.multi_reduction <maximumf>, %505, %cst_138 [1] : vector<2x8xf32> to vector<2xf32>
    %507 = vector.shape_cast %506 : vector<2xf32> to vector<2x1xf32>
    %508 = vector.broadcast %507 : vector<2x1xf32> to vector<2x8xf32>
    %509 = arith.subf %505, %508 : vector<2x8xf32>
    %510 = math.exp %509 : vector<2x8xf32>
    %cst_139 = arith.constant dense<0.000000e+00> : vector<2xf32>
    %511 = vector.multi_reduction <add>, %510, %cst_139 [1] : vector<2x8xf32> to vector<2xf32>
    %512 = vector.shape_cast %511 : vector<2xf32> to vector<2x1xf32>
    %513 = math.log %512 : vector<2x1xf32>
    %514 = arith.addf %513, %507 : vector<2x1xf32>
    %515 = arith.subf %317, %514 : vector<2x1xf32>
    %cst_140 = arith.constant dense<0.000000e+00> : vector<1xf32>
    %516 = vector.multi_reduction <add>, %515, %cst_140 [0] : vector<2x1xf32> to vector<1xf32>
    %517 = vector.shape_cast %516 : vector<1xf32> to vector<1x1xf32>
    %cst_141 = arith.constant 2.000000e+00 : f32
    %518 = vector.broadcast %cst_141 : f32 to vector<1x1xf32>
    %519 = arith.divf %517, %518 : vector<1x1xf32>
    %cst_142 = arith.constant 0.000000e+00 : f32
    %520 = vector.broadcast %cst_142 : f32 to vector<1x1xf32>
    %521 = arith.subf %520, %519 : vector<1x1xf32>
    %c0_143 = arith.constant 0 : index
    %c0_144 = arith.constant 0 : index
    %522 = vector.load %arg9[%c0_143, %c0_144] : memref<24x128xf32, #tpu.memory_space<vmem>>, vector<16x128xf32>
    tpu.vector_store %arg9[%c0_143, %c0_144], %268 {strides = array<i32>} : memref<24x128xf32, #tpu.memory_space<vmem>>, vector<16x128xf32>,
    %cst_145 = arith.constant 0.000000e+00 : f32
    %523 = vector.broadcast %cst_145 : f32 to vector<8x128xf32>
    %524 = vector.broadcast %521 : vector<1x1xf32> to vector<8x128xf32>
    %525 = arith.addf %523, %524 : vector<8x128xf32>
    %c16_146 = arith.constant 16 : index
    %c0_147 = arith.constant 0 : index
    %526 = vector.load %arg9[%c16_146, %c0_147] : memref<24x128xf32, #tpu.memory_space<vmem>>, vector<8x128xf32>
    tpu.vector_store %arg9[%c16_146, %c0_147], %525 {strides = array<i32>} : memref<24x128xf32, #tpu.memory_space<vmem>>, vector<8x128xf32>,
    return
  }
}

</mosaic_0001>

<llo_original>
// kernel: bert_crf_forward.1
$region0: #{bert_crf_forward.1}
  #allocation0 [shape = 'u32[]', space=smem, size = 0x4, offset = 0x4, fixed_abs, tag = 'smem constant byte address 0x4 - core index']
  #allocation1 [shape = 'u32[72,128]{1,0:T(1,128)}', space=vmem, size = 0x9000, scoped, tag = 'internal scratch']
  %s0 = inlined_call_operand.vmem [shape: f32[16,32], index: 0, kind: input, shape index: {}]
  %s1 = inlined_call_operand.vmem [shape: f32[2,8], index: 1, kind: input, shape index: {}]
  %s2 = inlined_call_operand.vmem [shape: s32[2,8,1], index: 2, kind: input, shape index: {}]
  %s3 = inlined_call_operand.vmem [shape: f32[32,128], index: 3, kind: input, shape index: {}]
  %s4 = inlined_call_operand.vmem [shape: f32[2,32,96], index: 4, kind: input, shape index: {}]
  %s5 = inlined_call_operand.vmem [shape: f32[2,32,32], index: 5, kind: input, shape index: {}]
  %s6 = inlined_call_operand.vmem [shape: f32[2,32,64], index: 6, kind: input, shape index: {}]
  %s7 = inlined_call_operand.vmem [shape: f32[2,64,32], index: 7, kind: input, shape index: {}]
  %s8 = inlined_call_operand.vmem [shape: f32[32,128], index: 8, kind: input, shape index: {}]
  %s9 = inlined_call_operand.vmem [shape: f32[24,128], index: 9, kind: output, shape index: {}]
  %s10 = sld [smem:[#allocation0]]
  $region46: #{bert_crf_forward.1} parent=0
    _
  %s12 = ssub.s32 1, %s10
  %s13 = scalar_select 0, %s12, %s10
  // Predicated region
  $region2: #{bert_crf_forward.1} parent=0 // pred_check
    _
  $region3: #{bert_crf_forward.1} parent=0 // pred_check_branch
    %15 = sbr.rel (0) target = $region5
  $region4: #{bert_crf_forward.1} parent=0 // pred_region
    _
  $region5: #{bert_crf_forward.1} parent=0 // pred_fallthru
    _
  // Predicated region
  $region6: #{bert_crf_forward.1} parent=0 // pred_check
    _
  $region7: #{bert_crf_forward.1} parent=0 // pred_check_branch
    %17 = sbr.rel (0) target = $region9
  $region8: #{bert_crf_forward.1} parent=0 // pred_region
    _
  $region9: #{bert_crf_forward.1} parent=0 // pred_fallthru
    _
  // Predicated region
  $region10: #{bert_crf_forward.1} parent=0 // pred_check
    _
  $region11: #{bert_crf_forward.1} parent=0 // pred_check_branch
    %19 = sbr.rel (0) target = $region13
  $region12: #{bert_crf_forward.1} parent=0 // pred_region
    _
  $region13: #{bert_crf_forward.1} parent=0 // pred_fallthru
    _
  // Predicated region
  $region14: #{bert_crf_forward.1} parent=0 // pred_check
    _
  $region15: #{bert_crf_forward.1} parent=0 // pred_check_branch
    %21 = sbr.rel (0) target = $region17
  $region16: #{bert_crf_forward.1} parent=0 // pred_region
    _
  $region17: #{bert_crf_forward.1} parent=0 // pred_fallthru
    _
  // Predicated region
  $region18: #{bert_crf_forward.1} parent=0 // pred_check
    _
  $region19: #{bert_crf_forward.1} parent=0 // pred_check_branch
    %23 = sbr.rel (0) target = $region21
  $region20: #{bert_crf_forward.1} parent=0 // pred_region
    _
  $region21: #{bert_crf_forward.1} parent=0 // pred_fallthru
    _
  // Predicated region
  $region22: #{bert_crf_forward.1} parent=0 // pred_check
    _
  $region23: #{bert_crf_forward.1} parent=0 // pred_check_branch
    %25 = sbr.rel (0) target = $region25
  $region24: #{bert_crf_forward.1} parent=0 // pred_region
    _
  $region25: #{bert_crf_forward.1} parent=0 // pred_fallthru
    _
  // Predicated region
  $region26: #{bert_crf_forward.1} parent=0 // pred_check
    _
  $region27: #{bert_crf_forward.1} parent=0 // pred_check_branch
    %27 = sbr.rel (0) target = $region29
  $region28: #{bert_crf_forward.1} parent=0 // pred_region
    _
  $region29: #{bert_crf_forward.1} parent=0 // pred_fallthru
    _
  // Predicated region
  $region30: #{bert_crf_forward.1} parent=0 // pred_check
    _
  $region31: #{bert_crf_forward.1} parent=0 // pred_check_branch
    %29 = sbr.rel (0) target = $region33
  $region32: #{bert_crf_forward.1} parent=0 // pred_region
    _
  $region33: #{bert_crf_forward.1} parent=0 // pred_fallthru
    _
  // Predicated region
  $region34: #{bert_crf_forward.1} parent=0 // pred_check
    _
  $region35: #{bert_crf_forward.1} parent=0 // pred_check_branch
    %31 = sbr.rel (0) target = $region37
  $region36: #{bert_crf_forward.1} parent=0 // pred_region
    _
  $region37: #{bert_crf_forward.1} parent=0 // pred_fallthru
    _
  %v32 = vld [vmem:[%s0] sm:$0xff]
  %v33 = vld [vmem:[%s0 + $0x8] sm:$0xff]
  %v34 = vld [vmem:[%s3] sm:$0x1]
  %v35 = vld [vmem:[%s3 + $0x1] sm:$0x1]
  %vm36 = vcmask 261120
  %v37 = vsel %vm36, %v32, 0.0
  %38 = vadd.xlane.f32.xlu0 %v37
  %v39 = vpop.xlane.xlu0 %38
  %v40 = vsel %vm36, %v33, 0.0
  %41 = vadd.xlane.f32.xlu0 %v40
  %v42 = vpop.xlane.xlu0 %41
  %v43 = vrcp.pop 32.0
  %v44 = vmul.f32 32.0, %v43
  %v45 = vsub.f32 1.0, %v44
  %v46 = vmul.f32 %v43, %v45
  %v47 = vadd.f32 %v43, %v46
  %vm48 = vweird.f32 %v43
  %v49 = vsel %vm48, %v43, %v47
  %v50 = vmul.f32 %v39, %v49
  %v51 = vmul.f32 %v42, %v49
  %v52 = vsub.f32 %v32, %v50
  %v53 = vsub.f32 %v33, %v51
  %v54 = vmul.f32 %v52, %v52
  %v55 = vmul.f32 %v53, %v53
  %v56 = vsel %vm36, %v54, 0.0
  %57 = vadd.xlane.f32.xlu0 %v56
  %v58 = vpop.xlane.xlu0 %57
  %v59 = vsel %vm36, %v55, 0.0
  %60 = vadd.xlane.f32.xlu0 %v59
  %v61 = vpop.xlane.xlu0 %60
  %v62 = vmul.f32 %v58, %v49
  %v63 = vmul.f32 %v61, %v49
  %v64 = vadd.f32 %v62, 1e-12
  %v65 = vadd.f32 %v63, 1e-12
  %v66 = vrsqrt.pop %v64
  %v67 = vmul.f32 %v66, %v64
  %v68 = vmul.f32 %v67, %v66
  %v69 = vmul.f32 0.5, %v68
  %v70 = vsub.f32 1.5, %v69
  %v71 = vmul.f32 %v66, %v70
  %vm72 = vweird.f32 %v64
  %vm73 = vweird.f32 %v66
  %vm74 = vmor %vm72, %vm73
  %v75 = vsel %vm74, %v66, %v71
  %v76 = vrsqrt.pop %v65
  %v77 = vmul.f32 %v76, %v65
  %v78 = vmul.f32 %v77, %v76
  %v79 = vmul.f32 0.5, %v78
  %v80 = vsub.f32 1.5, %v79
  %v81 = vmul.f32 %v76, %v80
  %vm82 = vweird.f32 %v65
  %vm83 = vweird.f32 %v76
  %vm84 = vmor %vm82, %vm83
  %v85 = vsel %vm84, %v76, %v81
  %v86 = vmul.f32 %v52, %v75
  %v87 = vmul.f32 %v53, %v85
  %v88 = vperm.slane %v34, 0
  %v89 = vmul.f32 %v86, %v88
  %v90 = vmul.f32 %v87, %v88
  %v91 = vperm.slane %v35, 0
  %v92 = vadd.f32 %v89, %v91
  %v93 = vadd.f32 %v90, %v91
  %v94 = vld [vmem:[%s1] sm:$0x3]
  %v96 = vrot.slane %v94, 6
  %vm98 = vcmask 1041408
  %v99 = vsel %vm98, %v94, %v96
  %v100 = vsub.f32 1.0, %v99
  %v101 = vmul.f32 %v100, -1e+09
  %v103 = vrot.slane %v101, 1
  %v104 = vrot.slane %v101, 2
  %v105 = vrot.slane %v101, 3
  %v106 = vld [vmem:[%s4] sm:$0xff]
  %v107 = vld [vmem:[%s4 + $0x8] sm:$0xff]
  %v108 = vld [vmem:[%s4 + $0x10] sm:$0xff]
  %v109 = vld [vmem:[%s4 + $0x18] sm:$0xff]
  %v110 = vld [vmem:[%s3 + $0x10] sm:$0x1]
  %v111 = vperm.slane %v110, 0
  %v113 = vsel %vm36, %v92, 0
  %v116 = vsel %vm36, %v93, 0
  %118 = vmatpush.msra.mxu0 0.0
  %119 = vmatpush.msra.mxu0 0.0
  %120 = vmatpush.msra.mxu0 0.0
  %121 = vmatpush.msra.mxu0 0.0
  %122 = vmatpush.msra.mxu0 0.0
  %123 = vmatpush.msra.mxu0 0.0
  %124 = vmatpush.msra.mxu0 0.0
  %125 = vmatpush.msra.mxu0 0.0
  %126 = vmatpush.msra.mxu0 0.0
  %127 = vmatpush.msra.mxu0 0.0
  %128 = vmatpush.msra.mxu0 0.0
  %129 = vmatpush.msra.mxu0 0.0
  %130 = vmatpush.msra.mxu0 %v109
  %131 = vmatpush.msra.mxu0 %v108
  %132 = vmatpush.msra.mxu0 %v107
  %133 = vmatpush.msra.mxu0 %v106
  %134 = vmatmul.f32.gmra.mxu0 %v113
  %v135 = vpop.f32.mrf.mxu0
  %v136 = vadd.f32 %v111, %v135
  %137 = vmatmul.f32.gmra.mxu0 %v116
  %v138 = vpop.f32.mrf.mxu0
  %v139 = vadd.f32 %v111, %v138
  %140 = vdwg.mxu0
  %143 = vrot.lane.b32.xlu0 %v136, 80
  %v144 = vpop.permute.xlu0 %143
  %145 = vrot.lane.b32.xlu0 %v139, 80
  %v146 = vpop.permute.xlu0 %145
  %147 = vrot.lane.b32.xlu0 %v136, 112
  %v148 = vpop.permute.xlu0 %147
  %vm149 = vcmask 130048
  %v150 = vsel %vm149, %v136, 0
  %v152 = vsel %vm149, %v148, 0
  %154 = vmatpush.xpose.msra.mxu0 0.0
  %155 = vmatpush.xpose.msra.mxu0 0.0
  %156 = vmatpush.xpose.msra.mxu0 0.0
  %157 = vmatpush.xpose.msra.mxu0 0.0
  %158 = vmatpush.xpose.msra.mxu0 0.0
  %159 = vmatpush.xpose.msra.mxu0 0.0
  %160 = vmatpush.xpose.msra.mxu0 0.0
  %161 = vmatpush.xpose.msra.mxu0 0.0
  %162 = vmatpush.xpose.msra.mxu0 0.0
  %163 = vmatpush.xpose.msra.mxu0 0.0
  %164 = vmatpush.xpose.msra.mxu0 0.0
  %165 = vmatpush.xpose.msra.mxu0 0.0
  %166 = vmatpush.xpose.msra.mxu0 0.0
  %167 = vmatpush.xpose.msra.mxu0 0.0
  %168 = vmatpush.xpose.msra.mxu0 0.0
  %169 = vmatpush.xpose.msra.mxu0 %v152
  %170 = vmatmul.f32.gmra.mxu0 %v150
  %v171 = vpop.f32.mrf.mxu0
  %v172 = vadd.f32 0.0, %v171
  %173 = vdwg.mxu0
  %174 = vrot.lane.b32.xlu0 %v139, 112
  %v175 = vpop.permute.xlu0 %174
  %v176 = vsel %vm149, %v139, 0
  %v178 = vsel %vm149, %v175, 0
  %180 = vmatpush.xpose.msra.mxu0 0.0
  %181 = vmatpush.xpose.msra.mxu0 0.0
  %182 = vmatpush.xpose.msra.mxu0 0.0
  %183 = vmatpush.xpose.msra.mxu0 0.0
  %184 = vmatpush.xpose.msra.mxu0 0.0
  %185 = vmatpush.xpose.msra.mxu0 0.0
  %186 = vmatpush.xpose.msra.mxu0 0.0
  %187 = vmatpush.xpose.msra.mxu0 0.0
  %188 = vmatpush.xpose.msra.mxu0 0.0
  %189 = vmatpush.xpose.msra.mxu0 0.0
  %190 = vmatpush.xpose.msra.mxu0 0.0
  %191 = vmatpush.xpose.msra.mxu0 0.0
  %192 = vmatpush.xpose.msra.mxu0 0.0
  %193 = vmatpush.xpose.msra.mxu0 0.0
  %194 = vmatpush.xpose.msra.mxu0 0.0
  %195 = vmatpush.xpose.msra.mxu0 %v178
  %196 = vmatmul.f32.gmra.mxu0 %v176
  %v197 = vpop.f32.mrf.mxu0
  %v198 = vadd.f32 0.0, %v197
  %199 = vdwg.mxu0
  %200 = vrot.lane.b32.xlu0 %v144, 112
  %v201 = vpop.permute.xlu0 %200
  %v202 = vsel %vm149, %v144, 0
  %v204 = vsel %vm149, %v201, 0
  %206 = vmatpush.xpose.msra.mxu0 0.0
  %207 = vmatpush.xpose.msra.mxu0 0.0
  %208 = vmatpush.xpose.msra.mxu0 0.0
  %209 = vmatpush.xpose.msra.mxu0 0.0
  %210 = vmatpush.xpose.msra.mxu0 0.0
  %211 = vmatpush.xpose.msra.mxu0 0.0
  %212 = vmatpush.xpose.msra.mxu0 0.0
  %213 = vmatpush.xpose.msra.mxu0 0.0
  %214 = vmatpush.xpose.msra.mxu0 0.0
  %215 = vmatpush.xpose.msra.mxu0 0.0
  %216 = vmatpush.xpose.msra.mxu0 0.0
  %217 = vmatpush.xpose.msra.mxu0 0.0
  %218 = vmatpush.xpose.msra.mxu0 0.0
  %219 = vmatpush.xpose.msra.mxu0 0.0
  %220 = vmatpush.xpose.msra.mxu0 0.0
  %221 = vmatpush.xpose.msra.mxu0 %v204
  %222 = vmatmul.f32.gmra.mxu0 %v202
  %v223 = vpop.f32.mrf.mxu0
  %v224 = vadd.f32 0.0, %v223
  %225 = vdwg.mxu0
  %226 = vrot.lane.b32.xlu0 %v146, 112
  %v227 = vpop.permute.xlu0 %226
  %v228 = vsel %vm149, %v146, 0
  %v230 = vsel %vm149, %v227, 0
  %232 = vmatpush.xpose.msra.mxu0 0.0
  %233 = vmatpush.xpose.msra.mxu0 0.0
  %234 = vmatpush.xpose.msra.mxu0 0.0
  %235 = vmatpush.xpose.msra.mxu0 0.0
  %236 = vmatpush.xpose.msra.mxu0 0.0
  %237 = vmatpush.xpose.msra.mxu0 0.0
  %238 = vmatpush.xpose.msra.mxu0 0.0
  %239 = vmatpush.xpose.msra.mxu0 0.0
  %240 = vmatpush.xpose.msra.mxu0 0.0
  %241 = vmatpush.xpose.msra.mxu0 0.0
  %242 = vmatpush.xpose.msra.mxu0 0.0
  %243 = vmatpush.xpose.msra.mxu0 0.0
  %244 = vmatpush.xpose.msra.mxu0 0.0
  %245 = vmatpush.xpose.msra.mxu0 0.0
  %246 = vmatpush.xpose.msra.mxu0 0.0
  %247 = vmatpush.xpose.msra.mxu0 %v230
  %248 = vmatmul.f32.gmra.mxu0 %v228
  %v249 = vpop.f32.mrf.mxu0
  %v250 = vadd.f32 0.0, %v249
  %251 = vdwg.mxu0
  %v252 = vmul.f32 %v172, 0.25
  %v253 = vmul.f32 %v198, 0.25
  %v254 = vmul.f32 %v224, 0.25
  %v255 = vmul.f32 %v250, 0.25
  %v256 = vperm.slane %v101, 0
  %v257 = vperm.slane %v103, 0
  %v258 = vperm.slane %v104, 0
  %v259 = vperm.slane %v105, 0
  %v264 = vadd.f32 %v252, %v256
  %v265 = vadd.f32 %v253, %v257
  %v266 = vadd.f32 %v254, %v258
  %v267 = vadd.f32 %v255, %v259
  %vm268 = vcmask 64512
  %v269 = vsel %vm268, %v264, -inf
  %270 = vmax.xlane.f32.xlu0 %v269
  %v271 = vpop.xlane.xlu0 %270
  %v272 = vsel %vm268, %v265, -inf
  %273 = vmax.xlane.f32.xlu0 %v272
  %v274 = vpop.xlane.xlu0 %273
  %v275 = vsel %vm268, %v266, -inf
  %276 = vmax.xlane.f32.xlu0 %v275
  %v277 = vpop.xlane.xlu0 %276
  %v278 = vsel %vm268, %v267, -inf
  %279 = vmax.xlane.f32.xlu0 %v278
  %v280 = vpop.xlane.xlu0 %279
  %v281 = vsub.f32 %v264, %v271
  %v282 = vsub.f32 %v265, %v274
  %v283 = vsub.f32 %v266, %v277
  %v284 = vsub.f32 %v267, %v280
  %v285 = vmul.f32 %v281, 1.442695
  %v286 = vpow.pop %v285
  %v287 = vmul.f32 %v282, 1.442695
  %v288 = vpow.pop %v287
  %v289 = vmul.f32 %v283, 1.442695
  %v290 = vpow.pop %v289
  %v291 = vmul.f32 %v284, 1.442695
  %v292 = vpow.pop %v291
  %v293 = vsel %vm268, %v286, 0.0
  %294 = vadd.xlane.f32.xlu0 %v293
  %v295 = vpop.xlane.xlu0 %294
  %v296 = vsel %vm268, %v288, 0.0
  %297 = vadd.xlane.f32.xlu0 %v296
  %v298 = vpop.xlane.xlu0 %297
  %v299 = vsel %vm268, %v290, 0.0
  %300 = vadd.xlane.f32.xlu0 %v299
  %v301 = vpop.xlane.xlu0 %300
  %v302 = vsel %vm268, %v292, 0.0
  %303 = vadd.xlane.f32.xlu0 %v302
  %v304 = vpop.xlane.xlu0 %303
  %v305 = vrcp.pop %v295
  %v306 = vrcp.pop %v298
  %v307 = vrcp.pop %v301
  %v308 = vrcp.pop %v304
  %v309 = vmul.f32 %v286, %v305
  %v310 = vmul.f32 %v288, %v306
  %v311 = vmul.f32 %v290, %v307
  %v312 = vmul.f32 %v292, %v308
  %313 = vrot.lane.b32.xlu0 %v136, 96
  %v314 = vpop.permute.xlu0 %313
  %v317 = vsel %vm268, %v309, 0
  %319 = vmatpush.msra.mxu0 0.0
  %320 = vmatpush.msra.mxu0 0.0
  %321 = vmatpush.msra.mxu0 0.0
  %322 = vmatpush.msra.mxu0 0.0
  %323 = vmatpush.msra.mxu0 0.0
  %324 = vmatpush.msra.mxu0 0.0
  %325 = vmatpush.msra.mxu0 0.0
  %326 = vmatpush.msra.mxu0 0.0
  %327 = vmatpush.msra.mxu0 0.0
  %328 = vmatpush.msra.mxu0 0.0
  %329 = vmatpush.msra.mxu0 0.0
  %330 = vmatpush.msra.mxu0 0.0
  %331 = vmatpush.msra.mxu0 0.0
  %332 = vmatpush.msra.mxu0 0.0
  %333 = vmatpush.msra.mxu0 0.0
  %334 = vmatpush.msra.mxu0 %v314
  %335 = vmatmul.f32.gmra.mxu0 %v317
  %v336 = vpop.f32.mrf.mxu0
  %v337 = vadd.f32 0.0, %v336
  %338 = vdwg.mxu0
  %339 = vrot.lane.b32.xlu0 %v139, 96
  %v340 = vpop.permute.xlu0 %339
  %v343 = vsel %vm268, %v310, 0
  %345 = vmatpush.msra.mxu0 0.0
  %346 = vmatpush.msra.mxu0 0.0
  %347 = vmatpush.msra.mxu0 0.0
  %348 = vmatpush.msra.mxu0 0.0
  %349 = vmatpush.msra.mxu0 0.0
  %350 = vmatpush.msra.mxu0 0.0
  %351 = vmatpush.msra.mxu0 0.0
  %352 = vmatpush.msra.mxu0 0.0
  %353 = vmatpush.msra.mxu0 0.0
  %354 = vmatpush.msra.mxu0 0.0
  %355 = vmatpush.msra.mxu0 0.0
  %356 = vmatpush.msra.mxu0 0.0
  %357 = vmatpush.msra.mxu0 0.0
  %358 = vmatpush.msra.mxu0 0.0
  %359 = vmatpush.msra.mxu0 0.0
  %360 = vmatpush.msra.mxu0 %v340
  %361 = vmatmul.f32.gmra.mxu0 %v343
  %v362 = vpop.f32.mrf.mxu0
  %v363 = vadd.f32 0.0, %v362
  %364 = vdwg.mxu0
  %365 = vrot.lane.b32.xlu0 %v144, 96
  %v366 = vpop.permute.xlu0 %365
  %v369 = vsel %vm268, %v311, 0
  %371 = vmatpush.msra.mxu0 0.0
  %372 = vmatpush.msra.mxu0 0.0
  %373 = vmatpush.msra.mxu0 0.0
  %374 = vmatpush.msra.mxu0 0.0
  %375 = vmatpush.msra.mxu0 0.0
  %376 = vmatpush.msra.mxu0 0.0
  %377 = vmatpush.msra.mxu0 0.0
  %378 = vmatpush.msra.mxu0 0.0
  %379 = vmatpush.msra.mxu0 0.0
  %380 = vmatpush.msra.mxu0 0.0
  %381 = vmatpush.msra.mxu0 0.0
  %382 = vmatpush.msra.mxu0 0.0
  %383 = vmatpush.msra.mxu0 0.0
  %384 = vmatpush.msra.mxu0 0.0
  %385 = vmatpush.msra.mxu0 0.0
  %386 = vmatpush.msra.mxu0 %v366
  %387 = vmatmul.f32.gmra.mxu0 %v369
  %v388 = vpop.f32.mrf.mxu0
  %v389 = vadd.f32 0.0, %v388
  %390 = vdwg.mxu0
  %391 = vrot.lane.b32.xlu0 %v146, 96
  %v392 = vpop.permute.xlu0 %391
  %v395 = vsel %vm268, %v312, 0
  %397 = vmatpush.msra.mxu0 0.0
  %398 = vmatpush.msra.mxu0 0.0
  %399 = vmatpush.msra.mxu0 0.0
  %400 = vmatpush.msra.mxu0 0.0
  %401 = vmatpush.msra.mxu0 0.0
  %402 = vmatpush.msra.mxu0 0.0
  %403 = vmatpush.msra.mxu0 0.0
  %404 = vmatpush.msra.mxu0 0.0
  %405 = vmatpush.msra.mxu0 0.0
  %406 = vmatpush.msra.mxu0 0.0
  %407 = vmatpush.msra.mxu0 0.0
  %408 = vmatpush.msra.mxu0 0.0
  %409 = vmatpush.msra.mxu0 0.0
  %410 = vmatpush.msra.mxu0 0.0
  %411 = vmatpush.msra.mxu0 0.0
  %412 = vmatpush.msra.mxu0 %v392
  %413 = vmatmul.f32.gmra.mxu0 %v395
  %v414 = vpop.f32.mrf.mxu0
  %v415 = vadd.f32 0.0, %v414
  %416 = vdwg.mxu0
  %419 = vrot.lane.b32.xlu0 %v389, 16
  %v420 = vpop.permute.xlu0 %419
  %421 = vrot.lane.b32.xlu0 %v415, 16
  %v422 = vpop.permute.xlu0 %421
  %v425 = vsel %vm149, %v337, %v420
  %v426 = vsel %vm149, %v363, %v422
  %v427 = vld [vmem:[%s5] sm:$0xff]
  %v428 = vld [vmem:[%s5 + $0x8] sm:$0xff]
  %v429 = vld [vmem:[%s5 + $0x10] sm:$0xff]
  %v430 = vld [vmem:[%s5 + $0x18] sm:$0xff]
  %v431 = vld [vmem:[%s3 + $0x11] sm:$0x1]
  %v432 = vperm.slane %v431, 0
  %v434 = vsel %vm36, %v425, 0
  %v437 = vsel %vm36, %v426, 0
  %439 = vmatpush.msra.mxu0 0.0
  %440 = vmatpush.msra.mxu0 0.0
  %441 = vmatpush.msra.mxu0 0.0
  %442 = vmatpush.msra.mxu0 0.0
  %443 = vmatpush.msra.mxu0 0.0
  %444 = vmatpush.msra.mxu0 0.0
  %445 = vmatpush.msra.mxu0 0.0
  %446 = vmatpush.msra.mxu0 0.0
  %447 = vmatpush.msra.mxu0 0.0
  %448 = vmatpush.msra.mxu0 0.0
  %449 = vmatpush.msra.mxu0 0.0
  %450 = vmatpush.msra.mxu0 0.0
  %451 = vmatpush.msra.mxu0 %v430
  %452 = vmatpush.msra.mxu0 %v429
  %453 = vmatpush.msra.mxu0 %v428
  %454 = vmatpush.msra.mxu0 %v427
  %455 = vmatmul.f32.gmra.mxu0 %v434
  %v456 = vpop.f32.mrf.mxu0
  %v457 = vadd.f32 %v432, %v456
  %458 = vmatmul.f32.gmra.mxu0 %v437
  %v459 = vpop.f32.mrf.mxu0
  %v460 = vadd.f32 %v432, %v459
  %461 = vdwg.mxu0
  %v462 = vadd.f32 %v92, %v457
  %v463 = vadd.f32 %v93, %v460
  %v464 = vld [vmem:[%s3 + $0x12] sm:$0x1]
  %v465 = vld [vmem:[%s3 + $0x13] sm:$0x1]
  %v466 = vsel %vm36, %v462, 0.0
  %467 = vadd.xlane.f32.xlu0 %v466
  %v468 = vpop.xlane.xlu0 %467
  %v469 = vsel %vm36, %v463, 0.0
  %470 = vadd.xlane.f32.xlu0 %v469
  %v471 = vpop.xlane.xlu0 %470
  %v472 = vmul.f32 %v468, %v49
  %v473 = vmul.f32 %v471, %v49
  %v474 = vsub.f32 %v462, %v472
  %v475 = vsub.f32 %v463, %v473
  %v476 = vmul.f32 %v474, %v474
  %v477 = vmul.f32 %v475, %v475
  %v478 = vsel %vm36, %v476, 0.0
  %479 = vadd.xlane.f32.xlu0 %v478
  %v480 = vpop.xlane.xlu0 %479
  %v481 = vsel %vm36, %v477, 0.0
  %482 = vadd.xlane.f32.xlu0 %v481
  %v483 = vpop.xlane.xlu0 %482
  %v484 = vmul.f32 %v480, %v49
  %v485 = vmul.f32 %v483, %v49
  %v486 = vadd.f32 %v484, 1e-12
  %v487 = vadd.f32 %v485, 1e-12
  %v488 = vrsqrt.pop %v486
  %v489 = vmul.f32 %v488, %v486
  %v490 = vmul.f32 %v489, %v488
  %v491 = vmul.f32 0.5, %v490
  %v492 = vsub.f32 1.5, %v491
  %v493 = vmul.f32 %v488, %v492
  %vm494 = vweird.f32 %v486
  %vm495 = vweird.f32 %v488
  %vm496 = vmor %vm494, %vm495
  %v497 = vsel %vm496, %v488, %v493
  %v498 = vrsqrt.pop %v487
  %v499 = vmul.f32 %v498, %v487
  %v500 = vmul.f32 %v499, %v498
  %v501 = vmul.f32 0.5, %v500
  %v502 = vsub.f32 1.5, %v501
  %v503 = vmul.f32 %v498, %v502
  %vm504 = vweird.f32 %v487
  %vm505 = vweird.f32 %v498
  %vm506 = vmor %vm504, %vm505
  %v507 = vsel %vm506, %v498, %v503
  %v508 = vmul.f32 %v474, %v497
  %v509 = vmul.f32 %v475, %v507
  %v510 = vperm.slane %v464, 0
  %v511 = vmul.f32 %v508, %v510
  %v512 = vmul.f32 %v509, %v510
  %v513 = vperm.slane %v465, 0
  %v514 = vadd.f32 %v511, %v513
  %v515 = vadd.f32 %v512, %v513
  %v516 = vld [vmem:[%s6] sm:$0xff]
  %v517 = vld [vmem:[%s6 + $0x8] sm:$0xff]
  %v518 = vld [vmem:[%s6 + $0x10] sm:$0xff]
  %v519 = vld [vmem:[%s6 + $0x18] sm:$0xff]
  %v520 = vld [vmem:[%s3 + $0x14] sm:$0x1]
  %v521 = vperm.slane %v520, 0
  %v523 = vsel %vm36, %v514, 0
  %v526 = vsel %vm36, %v515, 0
  %528 = vmatpush.msra.mxu0 0.0
  %529 = vmatpush.msra.mxu0 0.0
  %530 = vmatpush.msra.mxu0 0.0
  %531 = vmatpush.msra.mxu0 0.0
  %532 = vmatpush.msra.mxu0 0.0
  %533 = vmatpush.msra.mxu0 0.0
  %534 = vmatpush.msra.mxu0 0.0
  %535 = vmatpush.msra.mxu0 0.0
  %536 = vmatpush.msra.mxu0 0.0
  %537 = vmatpush.msra.mxu0 0.0
  %538 = vmatpush.msra.mxu0 0.0
  %539 = vmatpush.msra.mxu0 0.0
  %540 = vmatpush.msra.mxu0 %v519
  %541 = vmatpush.msra.mxu0 %v518
  %542 = vmatpush.msra.mxu0 %v517
  %543 = vmatpush.msra.mxu0 %v516
  %544 = vmatmul.f32.gmra.mxu0 %v523
  %v545 = vpop.f32.mrf.mxu0
  %v546 = vadd.f32 %v521, %v545
  %547 = vmatmul.f32.gmra.mxu0 %v526
  %v548 = vpop.f32.mrf.mxu0
  %v549 = vadd.f32 %v521, %v548
  %550 = vdwg.mxu0
  %v551 = vmul.f32 %v546, 0.5
  %v552 = vmul.f32 %v549, 0.5
  %v553 = vmul.f32 %v546, 0.044715
  %v554 = vmul.f32 %v549, 0.044715
  %v555 = vmul.f32 %v553, %v546
  %v556 = vmul.f32 %v554, %v549
  %v557 = vmul.f32 %v555, %v546
  %v558 = vmul.f32 %v556, %v549
  %v559 = vadd.f32 %v546, %v557
  %v560 = vadd.f32 %v549, %v558
  %v561 = vmul.f32 %v559, 0.7978846
  %v562 = vmul.f32 %v560, 0.7978846
  %v563 = vtanh.pop %v561
  %v564 = vtanh.pop %v562
  %v565 = vadd.f32 %v563, 1.0
  %v566 = vadd.f32 %v564, 1.0
  %v567 = vmul.f32 %v551, %v565
  %v568 = vmul.f32 %v552, %v566
  %v569 = vld [vmem:[%s7] sm:$0xff]
  %v570 = vld [vmem:[%s7 + $0x8] sm:$0xff]
  %v571 = vld [vmem:[%s7 + $0x10] sm:$0xff]
  %v572 = vld [vmem:[%s7 + $0x18] sm:$0xff]
  %v573 = vld [vmem:[%s7 + $0x20] sm:$0xff]
  %v574 = vld [vmem:[%s7 + $0x28] sm:$0xff]
  %v575 = vld [vmem:[%s7 + $0x30] sm:$0xff]
  %v576 = vld [vmem:[%s7 + $0x38] sm:$0xff]
  %v577 = vld [vmem:[%s3 + $0x15] sm:$0x1]
  %v578 = vperm.slane %v577, 0
  %vm579 = vcmask 523264
  %v581 = vsel %vm579, %v567, 0
  %v584 = vsel %vm579, %v568, 0
  %586 = vmatpush.msra.mxu0 0.0
  %587 = vmatpush.msra.mxu0 0.0
  %588 = vmatpush.msra.mxu0 0.0
  %589 = vmatpush.msra.mxu0 0.0
  %590 = vmatpush.msra.mxu0 0.0
  %591 = vmatpush.msra.mxu0 0.0
  %592 = vmatpush.msra.mxu0 0.0
  %593 = vmatpush.msra.mxu0 0.0
  %594 = vmatpush.msra.mxu0 %v576
  %595 = vmatpush.msra.mxu0 %v575
  %596 = vmatpush.msra.mxu0 %v574
  %597 = vmatpush.msra.mxu0 %v573
  %598 = vmatpush.msra.mxu0 %v572
  %599 = vmatpush.msra.mxu0 %v571
  %600 = vmatpush.msra.mxu0 %v570
  %601 = vmatpush.msra.mxu0 %v569
  %602 = vmatmul.f32.gmra.mxu0 %v581
  %v603 = vpop.f32.mrf.mxu0
  %v604 = vadd.f32 %v578, %v603
  %605 = vmatmul.f32.gmra.mxu0 %v584
  %v606 = vpop.f32.mrf.mxu0
  %v607 = vadd.f32 %v578, %v606
  %608 = vdwg.mxu0
  %v609 = vadd.f32 %v514, %v604
  %v610 = vadd.f32 %v515, %v607
  %v611 = vld [vmem:[%s3 + $0x16] sm:$0x1]
  %v612 = vld [vmem:[%s3 + $0x17] sm:$0x1]
  %v613 = vsel %vm36, %v609, 0.0
  %614 = vadd.xlane.f32.xlu0 %v613
  %v615 = vpop.xlane.xlu0 %614
  %v616 = vsel %vm36, %v610, 0.0
  %617 = vadd.xlane.f32.xlu0 %v616
  %v618 = vpop.xlane.xlu0 %617
  %v619 = vmul.f32 %v615, %v49
  %v620 = vmul.f32 %v618, %v49
  %v621 = vsub.f32 %v609, %v619
  %v622 = vsub.f32 %v610, %v620
  %v623 = vmul.f32 %v621, %v621
  %v624 = vmul.f32 %v622, %v622
  %v625 = vsel %vm36, %v623, 0.0
  %626 = vadd.xlane.f32.xlu0 %v625
  %v627 = vpop.xlane.xlu0 %626
  %v628 = vsel %vm36, %v624, 0.0
  %629 = vadd.xlane.f32.xlu0 %v628
  %v630 = vpop.xlane.xlu0 %629
  %v631 = vmul.f32 %v627, %v49
  %v632 = vmul.f32 %v630, %v49
  %v633 = vadd.f32 %v631, 1e-12
  %v634 = vadd.f32 %v632, 1e-12
  %v635 = vrsqrt.pop %v633
  %v636 = vmul.f32 %v635, %v633
  %v637 = vmul.f32 %v636, %v635
  %v638 = vmul.f32 0.5, %v637
  %v639 = vsub.f32 1.5, %v638
  %v640 = vmul.f32 %v635, %v639
  %vm641 = vweird.f32 %v633
  %vm642 = vweird.f32 %v635
  %vm643 = vmor %vm641, %vm642
  %v644 = vsel %vm643, %v635, %v640
  %v645 = vrsqrt.pop %v634
  %v646 = vmul.f32 %v645, %v634
  %v647 = vmul.f32 %v646, %v645
  %v648 = vmul.f32 0.5, %v647
  %v649 = vsub.f32 1.5, %v648
  %v650 = vmul.f32 %v645, %v649
  %vm651 = vweird.f32 %v634
  %vm652 = vweird.f32 %v645
  %vm653 = vmor %vm651, %vm652
  %v654 = vsel %vm653, %v645, %v650
  %v655 = vmul.f32 %v621, %v644
  %v656 = vmul.f32 %v622, %v654
  %v657 = vperm.slane %v611, 0
  %v658 = vmul.f32 %v655, %v657
  %v659 = vmul.f32 %v656, %v657
  %v660 = vperm.slane %v612, 0
  %v661 = vadd.f32 %v658, %v660
  %v662 = vadd.f32 %v659, %v660
  %s663 = scalar_lea.vmem %s4, 32
  %v664 = vld [vmem:[%s663] sm:$0xff]
  %v665 = vld [vmem:[%s663 + $0x8] sm:$0xff]
  %v666 = vld [vmem:[%s663 + $0x10] sm:$0xff]
  %v667 = vld [vmem:[%s663 + $0x18] sm:$0xff]
  %v668 = vld [vmem:[%s3 + $0x18] sm:$0x1]
  %v669 = vperm.slane %v668, 0
  %v671 = vsel %vm36, %v661, 0
  %v674 = vsel %vm36, %v662, 0
  %676 = vmatpush.msra.mxu0 0.0
  %677 = vmatpush.msra.mxu0 0.0
  %678 = vmatpush.msra.mxu0 0.0
  %679 = vmatpush.msra.mxu0 0.0
  %680 = vmatpush.msra.mxu0 0.0
  %681 = vmatpush.msra.mxu0 0.0
  %682 = vmatpush.msra.mxu0 0.0
  %683 = vmatpush.msra.mxu0 0.0
  %684 = vmatpush.msra.mxu0 0.0
  %685 = vmatpush.msra.mxu0 0.0
  %686 = vmatpush.msra.mxu0 0.0
  %687 = vmatpush.msra.mxu0 0.0
  %688 = vmatpush.msra.mxu0 %v667
  %689 = vmatpush.msra.mxu0 %v666
  %690 = vmatpush.msra.mxu0 %v665
  %691 = vmatpush.msra.mxu0 %v664
  %692 = vmatmul.f32.gmra.mxu0 %v671
  %v693 = vpop.f32.mrf.mxu0
  %v694 = vadd.f32 %v669, %v693
  %695 = vmatmul.f32.gmra.mxu0 %v674
  %v696 = vpop.f32.mrf.mxu0
  %v697 = vadd.f32 %v669, %v696
  %698 = vdwg.mxu0
  %701 = vrot.lane.b32.xlu0 %v694, 80
  %v702 = vpop.permute.xlu0 %701
  %703 = vrot.lane.b32.xlu0 %v697, 80
  %v704 = vpop.permute.xlu0 %703
  %705 = vrot.lane.b32.xlu0 %v694, 112
  %v706 = vpop.permute.xlu0 %705
  %v707 = vsel %vm149, %v694, 0
  %v709 = vsel %vm149, %v706, 0
  %711 = vmatpush.xpose.msra.mxu0 0.0
  %712 = vmatpush.xpose.msra.mxu0 0.0
  %713 = vmatpush.xpose.msra.mxu0 0.0
  %714 = vmatpush.xpose.msra.mxu0 0.0
  %715 = vmatpush.xpose.msra.mxu0 0.0
  %716 = vmatpush.xpose.msra.mxu0 0.0
  %717 = vmatpush.xpose.msra.mxu0 0.0
  %718 = vmatpush.xpose.msra.mxu0 0.0
  %719 = vmatpush.xpose.msra.mxu0 0.0
  %720 = vmatpush.xpose.msra.mxu0 0.0
  %721 = vmatpush.xpose.msra.mxu0 0.0
  %722 = vmatpush.xpose.msra.mxu0 0.0
  %723 = vmatpush.xpose.msra.mxu0 0.0
  %724 = vmatpush.xpose.msra.mxu0 0.0
  %725 = vmatpush.xpose.msra.mxu0 0.0
  %726 = vmatpush.xpose.msra.mxu0 %v709
  %727 = vmatmul.f32.gmra.mxu0 %v707
  %v728 = vpop.f32.mrf.mxu0
  %v729 = vadd.f32 0.0, %v728
  %730 = vdwg.mxu0
  %731 = vrot.lane.b32.xlu0 %v697, 112
  %v732 = vpop.permute.xlu0 %731
  %v733 = vsel %vm149, %v697, 0
  %v735 = vsel %vm149, %v732, 0
  %737 = vmatpush.xpose.msra.mxu0 0.0
  %738 = vmatpush.xpose.msra.mxu0 0.0
  %739 = vmatpush.xpose.msra.mxu0 0.0
  %740 = vmatpush.xpose.msra.mxu0 0.0
  %741 = vmatpush.xpose.msra.mxu0 0.0
  %742 = vmatpush.xpose.msra.mxu0 0.0
  %743 = vmatpush.xpose.msra.mxu0 0.0
  %744 = vmatpush.xpose.msra.mxu0 0.0
  %745 = vmatpush.xpose.msra.mxu0 0.0
  %746 = vmatpush.xpose.msra.mxu0 0.0
  %747 = vmatpush.xpose.msra.mxu0 0.0
  %748 = vmatpush.xpose.msra.mxu0 0.0
  %749 = vmatpush.xpose.msra.mxu0 0.0
  %750 = vmatpush.xpose.msra.mxu0 0.0
  %751 = vmatpush.xpose.msra.mxu0 0.0
  %752 = vmatpush.xpose.msra.mxu0 %v735
  %753 = vmatmul.f32.gmra.mxu0 %v733
  %v754 = vpop.f32.mrf.mxu0
  %v755 = vadd.f32 0.0, %v754
  %756 = vdwg.mxu0
  %757 = vrot.lane.b32.xlu0 %v702, 112
  %v758 = vpop.permute.xlu0 %757
  %v759 = vsel %vm149, %v702, 0
  %v761 = vsel %vm149, %v758, 0
  %763 = vmatpush.xpose.msra.mxu0 0.0
  %764 = vmatpush.xpose.msra.mxu0 0.0
  %765 = vmatpush.xpose.msra.mxu0 0.0
  %766 = vmatpush.xpose.msra.mxu0 0.0
  %767 = vmatpush.xpose.msra.mxu0 0.0
  %768 = vmatpush.xpose.msra.mxu0 0.0
  %769 = vmatpush.xpose.msra.mxu0 0.0
  %770 = vmatpush.xpose.msra.mxu0 0.0
  %771 = vmatpush.xpose.msra.mxu0 0.0
  %772 = vmatpush.xpose.msra.mxu0 0.0
  %773 = vmatpush.xpose.msra.mxu0 0.0
  %774 = vmatpush.xpose.msra.mxu0 0.0
  %775 = vmatpush.xpose.msra.mxu0 0.0
  %776 = vmatpush.xpose.msra.mxu0 0.0
  %777 = vmatpush.xpose.msra.mxu0 0.0
  %778 = vmatpush.xpose.msra.mxu0 %v761
  %779 = vmatmul.f32.gmra.mxu0 %v759
  %v780 = vpop.f32.mrf.mxu0
  %v781 = vadd.f32 0.0, %v780
  %782 = vdwg.mxu0
  %783 = vrot.lane.b32.xlu0 %v704, 112
  %v784 = vpop.permute.xlu0 %783
  %v785 = vsel %vm149, %v704, 0
  %v787 = vsel %vm149, %v784, 0
  %789 = vmatpush.xpose.msra.mxu0 0.0
  %790 = vmatpush.xpose.msra.mxu0 0.0
  %791 = vmatpush.xpose.msra.mxu0 0.0
  %792 = vmatpush.xpose.msra.mxu0 0.0
  %793 = vmatpush.xpose.msra.mxu0 0.0
  %794 = vmatpush.xpose.msra.mxu0 0.0
  %795 = vmatpush.xpose.msra.mxu0 0.0
  %796 = vmatpush.xpose.msra.mxu0 0.0
  %797 = vmatpush.xpose.msra.mxu0 0.0
  %798 = vmatpush.xpose.msra.mxu0 0.0
  %799 = vmatpush.xpose.msra.mxu0 0.0
  %800 = vmatpush.xpose.msra.mxu0 0.0
  %801 = vmatpush.xpose.msra.mxu0 0.0
  %802 = vmatpush.xpose.msra.mxu0 0.0
  %803 = vmatpush.xpose.msra.mxu0 0.0
  %804 = vmatpush.xpose.msra.mxu0 %v787
  %805 = vmatmul.f32.gmra.mxu0 %v785
  %v806 = vpop.f32.mrf.mxu0
  %v807 = vadd.f32 0.0, %v806
  %808 = vdwg.mxu0
  %v809 = vmul.f32 %v729, 0.25
  %v810 = vmul.f32 %v755, 0.25
  %v811 = vmul.f32 %v781, 0.25
  %v812 = vmul.f32 %v807, 0.25
  %v813 = vadd.f32 %v809, %v256
  %v814 = vadd.f32 %v810, %v257
  %v815 = vadd.f32 %v811, %v258
  %v816 = vadd.f32 %v812, %v259
  %v817 = vsel %vm268, %v813, -inf
  %818 = vmax.xlane.f32.xlu0 %v817
  %v819 = vpop.xlane.xlu0 %818
  %v820 = vsel %vm268, %v814, -inf
  %821 = vmax.xlane.f32.xlu0 %v820
  %v822 = vpop.xlane.xlu0 %821
  %v823 = vsel %vm268, %v815, -inf
  %824 = vmax.xlane.f32.xlu0 %v823
  %v825 = vpop.xlane.xlu0 %824
  %v826 = vsel %vm268, %v816, -inf
  %827 = vmax.xlane.f32.xlu0 %v826
  %v828 = vpop.xlane.xlu0 %827
  %v829 = vsub.f32 %v813, %v819
  %v830 = vsub.f32 %v814, %v822
  %v831 = vsub.f32 %v815, %v825
  %v832 = vsub.f32 %v816, %v828
  %v833 = vmul.f32 %v829, 1.442695
  %v834 = vpow.pop %v833
  %v835 = vmul.f32 %v830, 1.442695
  %v836 = vpow.pop %v835
  %v837 = vmul.f32 %v831, 1.442695
  %v838 = vpow.pop %v837
  %v839 = vmul.f32 %v832, 1.442695
  %v840 = vpow.pop %v839
  %v841 = vsel %vm268, %v834, 0.0
  %842 = vadd.xlane.f32.xlu0 %v841
  %v843 = vpop.xlane.xlu0 %842
  %v844 = vsel %vm268, %v836, 0.0
  %845 = vadd.xlane.f32.xlu0 %v844
  %v846 = vpop.xlane.xlu0 %845
  %v847 = vsel %vm268, %v838, 0.0
  %848 = vadd.xlane.f32.xlu0 %v847
  %v849 = vpop.xlane.xlu0 %848
  %v850 = vsel %vm268, %v840, 0.0
  %851 = vadd.xlane.f32.xlu0 %v850
  %v852 = vpop.xlane.xlu0 %851
  %v853 = vrcp.pop %v843
  %v854 = vrcp.pop %v846
  %v855 = vrcp.pop %v849
  %v856 = vrcp.pop %v852
  %v857 = vmul.f32 %v834, %v853
  %v858 = vmul.f32 %v836, %v854
  %v859 = vmul.f32 %v838, %v855
  %v860 = vmul.f32 %v840, %v856
  %861 = vrot.lane.b32.xlu0 %v694, 96
  %v862 = vpop.permute.xlu0 %861
  %v865 = vsel %vm268, %v857, 0
  %867 = vmatpush.msra.mxu0 0.0
  %868 = vmatpush.msra.mxu0 0.0
  %869 = vmatpush.msra.mxu0 0.0
  %870 = vmatpush.msra.mxu0 0.0
  %871 = vmatpush.msra.mxu0 0.0
  %872 = vmatpush.msra.mxu0 0.0
  %873 = vmatpush.msra.mxu0 0.0
  %874 = vmatpush.msra.mxu0 0.0
  %875 = vmatpush.msra.mxu0 0.0
  %876 = vmatpush.msra.mxu0 0.0
  %877 = vmatpush.msra.mxu0 0.0
  %878 = vmatpush.msra.mxu0 0.0
  %879 = vmatpush.msra.mxu0 0.0
  %880 = vmatpush.msra.mxu0 0.0
  %881 = vmatpush.msra.mxu0 0.0
  %882 = vmatpush.msra.mxu0 %v862
  %883 = vmatmul.f32.gmra.mxu0 %v865
  %v884 = vpop.f32.mrf.mxu0
  %v885 = vadd.f32 0.0, %v884
  %886 = vdwg.mxu0
  %887 = vrot.lane.b32.xlu0 %v697, 96
  %v888 = vpop.permute.xlu0 %887
  %v891 = vsel %vm268, %v858, 0
  %893 = vmatpush.msra.mxu0 0.0
  %894 = vmatpush.msra.mxu0 0.0
  %895 = vmatpush.msra.mxu0 0.0
  %896 = vmatpush.msra.mxu0 0.0
  %897 = vmatpush.msra.mxu0 0.0
  %898 = vmatpush.msra.mxu0 0.0
  %899 = vmatpush.msra.mxu0 0.0
  %900 = vmatpush.msra.mxu0 0.0
  %901 = vmatpush.msra.mxu0 0.0
  %902 = vmatpush.msra.mxu0 0.0
  %903 = vmatpush.msra.mxu0 0.0
  %904 = vmatpush.msra.mxu0 0.0
  %905 = vmatpush.msra.mxu0 0.0
  %906 = vmatpush.msra.mxu0 0.0
  %907 = vmatpush.msra.mxu0 0.0
  %908 = vmatpush.msra.mxu0 %v888
  %909 = vmatmul.f32.gmra.mxu0 %v891
  %v910 = vpop.f32.mrf.mxu0
  %v911 = vadd.f32 0.0, %v910
  %912 = vdwg.mxu0
  %913 = vrot.lane.b32.xlu0 %v702, 96
  %v914 = vpop.permute.xlu0 %913
  %v917 = vsel %vm268, %v859, 0
  %919 = vmatpush.msra.mxu0 0.0
  %920 = vmatpush.msra.mxu0 0.0
  %921 = vmatpush.msra.mxu0 0.0
  %922 = vmatpush.msra.mxu0 0.0
  %923 = vmatpush.msra.mxu0 0.0
  %924 = vmatpush.msra.mxu0 0.0
  %925 = vmatpush.msra.mxu0 0.0
  %926 = vmatpush.msra.mxu0 0.0
  %927 = vmatpush.msra.mxu0 0.0
  %928 = vmatpush.msra.mxu0 0.0
  %929 = vmatpush.msra.mxu0 0.0
  %930 = vmatpush.msra.mxu0 0.0
  %931 = vmatpush.msra.mxu0 0.0
  %932 = vmatpush.msra.mxu0 0.0
  %933 = vmatpush.msra.mxu0 0.0
  %934 = vmatpush.msra.mxu0 %v914
  %935 = vmatmul.f32.gmra.mxu0 %v917
  %v936 = vpop.f32.mrf.mxu0
  %v937 = vadd.f32 0.0, %v936
  %938 = vdwg.mxu0
  %939 = vrot.lane.b32.xlu0 %v704, 96
  %v940 = vpop.permute.xlu0 %939
  %v943 = vsel %vm268, %v860, 0
  %945 = vmatpush.msra.mxu0 0.0
  %946 = vmatpush.msra.mxu0 0.0
  %947 = vmatpush.msra.mxu0 0.0
  %948 = vmatpush.msra.mxu0 0.0
  %949 = vmatpush.msra.mxu0 0.0
  %950 = vmatpush.msra.mxu0 0.0
  %951 = vmatpush.msra.mxu0 0.0
  %952 = vmatpush.msra.mxu0 0.0
  %953 = vmatpush.msra.mxu0 0.0
  %954 = vmatpush.msra.mxu0 0.0
  %955 = vmatpush.msra.mxu0 0.0
  %956 = vmatpush.msra.mxu0 0.0
  %957 = vmatpush.msra.mxu0 0.0
  %958 = vmatpush.msra.mxu0 0.0
  %959 = vmatpush.msra.mxu0 0.0
  %960 = vmatpush.msra.mxu0 %v940
  %961 = vmatmul.f32.gmra.mxu0 %v943
  %v962 = vpop.f32.mrf.mxu0
  %v963 = vadd.f32 0.0, %v962
  %964 = vdwg.mxu0
  %967 = vrot.lane.b32.xlu0 %v937, 16
  %v968 = vpop.permute.xlu0 %967
  %969 = vrot.lane.b32.xlu0 %v963, 16
  %v970 = vpop.permute.xlu0 %969
  %v973 = vsel %vm149, %v885, %v968
  %v974 = vsel %vm149, %v911, %v970
  %s975 = scalar_lea.vmem %s5, 32
  %v976 = vld [vmem:[%s975] sm:$0xff]
  %v977 = vld [vmem:[%s975 + $0x8] sm:$0xff]
  %v978 = vld [vmem:[%s975 + $0x10] sm:$0xff]
  %v979 = vld [vmem:[%s975 + $0x18] sm:$0xff]
  %v980 = vld [vmem:[%s3 + $0x19] sm:$0x1]
  %v981 = vperm.slane %v980, 0
  %v983 = vsel %vm36, %v973, 0
  %v986 = vsel %vm36, %v974, 0
  %988 = vmatpush.msra.mxu0 0.0
  %989 = vmatpush.msra.mxu0 0.0
  %990 = vmatpush.msra.mxu0 0.0
  %991 = vmatpush.msra.mxu0 0.0
  %992 = vmatpush.msra.mxu0 0.0
  %993 = vmatpush.msra.mxu0 0.0
  %994 = vmatpush.msra.mxu0 0.0
  %995 = vmatpush.msra.mxu0 0.0
  %996 = vmatpush.msra.mxu0 0.0
  %997 = vmatpush.msra.mxu0 0.0
  %998 = vmatpush.msra.mxu0 0.0
  %999 = vmatpush.msra.mxu0 0.0
  %1000 = vmatpush.msra.mxu0 %v979
  %1001 = vmatpush.msra.mxu0 %v978
  %1002 = vmatpush.msra.mxu0 %v977
  %1003 = vmatpush.msra.mxu0 %v976
  %1004 = vmatmul.f32.gmra.mxu0 %v983
  %v1005 = vpop.f32.mrf.mxu0
  %v1006 = vadd.f32 %v981, %v1005
  %1007 = vmatmul.f32.gmra.mxu0 %v986
  %v1008 = vpop.f32.mrf.mxu0
  %v1009 = vadd.f32 %v981, %v1008
  %1010 = vdwg.mxu0
  %v1011 = vadd.f32 %v661, %v1006
  %v1012 = vadd.f32 %v662, %v1009
  %v1013 = vld [vmem:[%s3 + $0x1a] sm:$0x1]
  %v1014 = vld [vmem:[%s3 + $0x1b] sm:$0x1]
  %v1015 = vsel %vm36, %v1011, 0.0
  %1016 = vadd.xlane.f32.xlu0 %v1015
  %v1017 = vpop.xlane.xlu0 %1016
  %v1018 = vsel %vm36, %v1012, 0.0
  %1019 = vadd.xlane.f32.xlu0 %v1018
  %v1020 = vpop.xlane.xlu0 %1019
  %v1021 = vmul.f32 %v1017, %v49
  %v1022 = vmul.f32 %v1020, %v49
  %v1023 = vsub.f32 %v1011, %v1021
  %v1024 = vsub.f32 %v1012, %v1022
  %v1025 = vmul.f32 %v1023, %v1023
  %v1026 = vmul.f32 %v1024, %v1024
  %v1027 = vsel %vm36, %v1025, 0.0
  %1028 = vadd.xlane.f32.xlu0 %v1027
  %v1029 = vpop.xlane.xlu0 %1028
  %v1030 = vsel %vm36, %v1026, 0.0
  %1031 = vadd.xlane.f32.xlu0 %v1030
  %v1032 = vpop.xlane.xlu0 %1031
  %v1033 = vmul.f32 %v1029, %v49
  %v1034 = vmul.f32 %v1032, %v49
  %v1035 = vadd.f32 %v1033, 1e-12
  %v1036 = vadd.f32 %v1034, 1e-12
  %v1037 = vrsqrt.pop %v1035
  %v1038 = vmul.f32 %v1037, %v1035
  %v1039 = vmul.f32 %v1038, %v1037
  %v1040 = vmul.f32 0.5, %v1039
  %v1041 = vsub.f32 1.5, %v1040
  %v1042 = vmul.f32 %v1037, %v1041
  %vm1043 = vweird.f32 %v1035
  %vm1044 = vweird.f32 %v1037
  %vm1045 = vmor %vm1043, %vm1044
  %v1046 = vsel %vm1045, %v1037, %v1042
  %v1047 = vrsqrt.pop %v1036
  %v1048 = vmul.f32 %v1047, %v1036
  %v1049 = vmul.f32 %v1048, %v1047
  %v1050 = vmul.f32 0.5, %v1049
  %v1051 = vsub.f32 1.5, %v1050
  %v1052 = vmul.f32 %v1047, %v1051
  %vm1053 = vweird.f32 %v1036
  %vm1054 = vweird.f32 %v1047
  %vm1055 = vmor %vm1053, %vm1054
  %v1056 = vsel %vm1055, %v1047, %v1052
  %v1057 = vmul.f32 %v1023, %v1046
  %v1058 = vmul.f32 %v1024, %v1056
  %v1059 = vperm.slane %v1013, 0
  %v1060 = vmul.f32 %v1057, %v1059
  %v1061 = vmul.f32 %v1058, %v1059
  %v1062 = vperm.slane %v1014, 0
  %v1063 = vadd.f32 %v1060, %v1062
  %v1064 = vadd.f32 %v1061, %v1062
  %s1065 = scalar_lea.vmem %s6, 32
  %v1066 = vld [vmem:[%s1065] sm:$0xff]
  %v1067 = vld [vmem:[%s1065 + $0x8] sm:$0xff]
  %v1068 = vld [vmem:[%s1065 + $0x10] sm:$0xff]
  %v1069 = vld [vmem:[%s1065 + $0x18] sm:$0xff]
  %v1070 = vld [vmem:[%s3 + $0x1c] sm:$0x1]
  %v1071 = vperm.slane %v1070, 0
  %v1073 = vsel %vm36, %v1063, 0
  %v1076 = vsel %vm36, %v1064, 0
  %1078 = vmatpush.msra.mxu0 0.0
  %1079 = vmatpush.msra.mxu0 0.0
  %1080 = vmatpush.msra.mxu0 0.0
  %1081 = vmatpush.msra.mxu0 0.0
  %1082 = vmatpush.msra.mxu0 0.0
  %1083 = vmatpush.msra.mxu0 0.0
  %1084 = vmatpush.msra.mxu0 0.0
  %1085 = vmatpush.msra.mxu0 0.0
  %1086 = vmatpush.msra.mxu0 0.0
  %1087 = vmatpush.msra.mxu0 0.0
  %1088 = vmatpush.msra.mxu0 0.0
  %1089 = vmatpush.msra.mxu0 0.0
  %1090 = vmatpush.msra.mxu0 %v1069
  %1091 = vmatpush.msra.mxu0 %v1068
  %1092 = vmatpush.msra.mxu0 %v1067
  %1093 = vmatpush.msra.mxu0 %v1066
  %1094 = vmatmul.f32.gmra.mxu0 %v1073
  %v1095 = vpop.f32.mrf.mxu0
  %v1096 = vadd.f32 %v1071, %v1095
  %1097 = vmatmul.f32.gmra.mxu0 %v1076
  %v1098 = vpop.f32.mrf.mxu0
  %v1099 = vadd.f32 %v1071, %v1098
  %1100 = vdwg.mxu0
  %v1101 = vmul.f32 %v1096, 0.5
  %v1102 = vmul.f32 %v1099, 0.5
  %v1103 = vmul.f32 %v1096, 0.044715
  %v1104 = vmul.f32 %v1099, 0.044715
  %v1105 = vmul.f32 %v1103, %v1096
  %v1106 = vmul.f32 %v1104, %v1099
  %v1107 = vmul.f32 %v1105, %v1096
  %v1108 = vmul.f32 %v1106, %v1099
  %v1109 = vadd.f32 %v1096, %v1107
  %v1110 = vadd.f32 %v1099, %v1108
  %v1111 = vmul.f32 %v1109, 0.7978846
  %v1112 = vmul.f32 %v1110, 0.7978846
  %v1113 = vtanh.pop %v1111
  %v1114 = vtanh.pop %v1112
  %v1115 = vadd.f32 %v1113, 1.0
  %v1116 = vadd.f32 %v1114, 1.0
  %v1117 = vmul.f32 %v1101, %v1115
  %v1118 = vmul.f32 %v1102, %v1116
  %s1119 = scalar_lea.vmem %s7, 64
  %v1120 = vld [vmem:[%s1119] sm:$0xff]
  %v1121 = vld [vmem:[%s1119 + $0x8] sm:$0xff]
  %v1122 = vld [vmem:[%s1119 + $0x10] sm:$0xff]
  %v1123 = vld [vmem:[%s1119 + $0x18] sm:$0xff]
  %v1124 = vld [vmem:[%s1119 + $0x20] sm:$0xff]
  %v1125 = vld [vmem:[%s1119 + $0x28] sm:$0xff]
  %v1126 = vld [vmem:[%s1119 + $0x30] sm:$0xff]
  %v1127 = vld [vmem:[%s1119 + $0x38] sm:$0xff]
  %v1128 = vld [vmem:[%s3 + $0x1d] sm:$0x1]
  %v1129 = vperm.slane %v1128, 0
  %v1131 = vsel %vm579, %v1117, 0
  %v1134 = vsel %vm579, %v1118, 0
  %1136 = vmatpush.msra.mxu0 0.0
  %1137 = vmatpush.msra.mxu0 0.0
  %1138 = vmatpush.msra.mxu0 0.0
  %1139 = vmatpush.msra.mxu0 0.0
  %1140 = vmatpush.msra.mxu0 0.0
  %1141 = vmatpush.msra.mxu0 0.0
  %1142 = vmatpush.msra.mxu0 0.0
  %1143 = vmatpush.msra.mxu0 0.0
  %1144 = vmatpush.msra.mxu0 %v1127
  %1145 = vmatpush.msra.mxu0 %v1126
  %1146 = vmatpush.msra.mxu0 %v1125
  %1147 = vmatpush.msra.mxu0 %v1124
  %1148 = vmatpush.msra.mxu0 %v1123
  %1149 = vmatpush.msra.mxu0 %v1122
  %1150 = vmatpush.msra.mxu0 %v1121
  %1151 = vmatpush.msra.mxu0 %v1120
  %1152 = vmatmul.f32.gmra.mxu0 %v1131
  %v1153 = vpop.f32.mrf.mxu0
  %v1154 = vadd.f32 %v1129, %v1153
  %1155 = vmatmul.f32.gmra.mxu0 %v1134
  %v1156 = vpop.f32.mrf.mxu0
  %v1157 = vadd.f32 %v1129, %v1156
  %1158 = vdwg.mxu0
  %v1159 = vadd.f32 %v1063, %v1154
  %v1160 = vadd.f32 %v1064, %v1157
  %v1161 = vld [vmem:[%s3 + $0x1e] sm:$0x1]
  %v1162 = vld [vmem:[%s3 + $0x1f] sm:$0x1]
  %v1163 = vsel %vm36, %v1159, 0.0
  %1164 = vadd.xlane.f32.xlu0 %v1163
  %v1165 = vpop.xlane.xlu0 %1164
  %v1166 = vsel %vm36, %v1160, 0.0
  %1167 = vadd.xlane.f32.xlu0 %v1166
  %v1168 = vpop.xlane.xlu0 %1167
  %v1169 = vmul.f32 %v1165, %v49
  %v1170 = vmul.f32 %v1168, %v49
  %v1171 = vsub.f32 %v1159, %v1169
  %v1172 = vsub.f32 %v1160, %v1170
  %v1173 = vmul.f32 %v1171, %v1171
  %v1174 = vmul.f32 %v1172, %v1172
  %v1175 = vsel %vm36, %v1173, 0.0
  %1176 = vadd.xlane.f32.xlu0 %v1175
  %v1177 = vpop.xlane.xlu0 %1176
  %v1178 = vsel %vm36, %v1174, 0.0
  %1179 = vadd.xlane.f32.xlu0 %v1178
  %v1180 = vpop.xlane.xlu0 %1179
  %v1181 = vmul.f32 %v1177, %v49
  %v1182 = vmul.f32 %v1180, %v49
  %v1183 = vadd.f32 %v1181, 1e-12
  %v1184 = vadd.f32 %v1182, 1e-12
  %v1185 = vrsqrt.pop %v1183
  %v1186 = vmul.f32 %v1185, %v1183
  %v1187 = vmul.f32 %v1186, %v1185
  %v1188 = vmul.f32 0.5, %v1187
  %v1189 = vsub.f32 1.5, %v1188
  %v1190 = vmul.f32 %v1185, %v1189
  %vm1191 = vweird.f32 %v1183
  %vm1192 = vweird.f32 %v1185
  %vm1193 = vmor %vm1191, %vm1192
  %v1194 = vsel %vm1193, %v1185, %v1190
  %v1195 = vrsqrt.pop %v1184
  %v1196 = vmul.f32 %v1195, %v1184
  %v1197 = vmul.f32 %v1196, %v1195
  %v1198 = vmul.f32 0.5, %v1197
  %v1199 = vsub.f32 1.5, %v1198
  %v1200 = vmul.f32 %v1195, %v1199
  %vm1201 = vweird.f32 %v1184
  %vm1202 = vweird.f32 %v1195
  %vm1203 = vmor %vm1201, %vm1202
  %v1204 = vsel %vm1203, %v1195, %v1200
  %v1205 = vmul.f32 %v1171, %v1194
  %v1206 = vmul.f32 %v1172, %v1204
  %v1207 = vperm.slane %v1161, 0
  %v1208 = vmul.f32 %v1205, %v1207
  %v1209 = vmul.f32 %v1206, %v1207
  %v1210 = vperm.slane %v1162, 0
  %v1211 = vadd.f32 %v1208, %v1210
  %v1212 = vadd.f32 %v1209, %v1210
  %v1213 = vld [vmem:[%s8] sm:$0xff]
  %v1214 = vld [vmem:[%s8 + $0x8] sm:$0xff]
  %v1215 = vld [vmem:[%s8 + $0x10] sm:$0xff]
  %v1216 = vld [vmem:[%s8 + $0x18] sm:$0xff]
  %v1217 = vld [vmem:[%s3 + $0x2] sm:$0x1]
  %v1218 = vperm.slane %v1217, 0
  %v1220 = vsel %vm36, %v1211, 0
  %v1223 = vsel %vm36, %v1212, 0
  %1225 = vmatpush.msra.mxu0 0.0
  %1226 = vmatpush.msra.mxu0 0.0
  %1227 = vmatpush.msra.mxu0 0.0
  %1228 = vmatpush.msra.mxu0 0.0
  %1229 = vmatpush.msra.mxu0 0.0
  %1230 = vmatpush.msra.mxu0 0.0
  %1231 = vmatpush.msra.mxu0 0.0
  %1232 = vmatpush.msra.mxu0 0.0
  %1233 = vmatpush.msra.mxu0 0.0
  %1234 = vmatpush.msra.mxu0 0.0
  %1235 = vmatpush.msra.mxu0 0.0
  %1236 = vmatpush.msra.mxu0 0.0
  %1237 = vmatpush.msra.mxu0 %v1216
  %1238 = vmatpush.msra.mxu0 %v1215
  %1239 = vmatpush.msra.mxu0 %v1214
  %1240 = vmatpush.msra.mxu0 %v1213
  %1241 = vmatmul.f32.gmra.mxu0 %v1220
  %v1242 = vpop.f32.mrf.mxu0
  %v1243 = vadd.f32 %v1218, %v1242
  %1244 = vmatmul.f32.gmra.mxu0 %v1223
  %v1245 = vpop.f32.mrf.mxu0
  %v1246 = vadd.f32 %v1218, %v1245
  %1247 = vdwg.mxu0
  %v1248 = vld [vmem:[%s2] sm:$0xff]
  %v1249 = vld [vmem:[%s2 + $0x8] sm:$0xff]
  %v1250 = vlaneseq
  %v1251 = vand.u32 %v1250, 127
  %1252 = vset.pattern.permute.xlu0 0
  %1253 = vperm.xlu0 %1252, %v1248
  %v1254 = vpop.permute.xlu0 %1253
  %1255 = vset.pattern.permute.xlu0 0
  %1256 = vperm.xlu0 %1255, %v1249
  %v1257 = vpop.permute.xlu0 %1256
  %vm1258 = vcmp.eq.s32.totalorder %v1254, %v1251
  %vm1259 = vcmp.eq.s32.totalorder %v1257, %v1251
  %v1260 = vsel %vm1258, 1, 0
  %v1261 = vsel %vm1259, 1, 0
  %v1262 = vcvt.s32.f32 %v1260
  %v1263 = vcvt.s32.f32 %v1261
  %v1264 = vld [vmem:[%s3 + $0x8] sm:$0xff]
  %v1265 = vld [vmem:[%s3 + $0x3] sm:$0x1]
  %v1266 = vld [vmem:[%s3 + $0x4] sm:$0x1]
  %v1267 = vmul.f32 %v1243, %v1262
  %v1268 = vmul.f32 %v1246, %v1263
  %v1269 = vsel %vm268, %v1267, 0.0
  %1270 = vadd.xlane.f32.xlu0 %v1269
  %v1271 = vpop.xlane.xlu0 %1270
  %v1272 = vsel %vm268, %v1268, 0.0
  %1273 = vadd.xlane.f32.xlu0 %v1272
  %v1274 = vpop.xlane.xlu0 %1273
  %v1276 = vsel %vm268, %v1262, 0
  %v1279 = vsel %vm268, %v1263, 0
  %1281 = vmatpush.msra.mxu0 0.0
  %1282 = vmatpush.msra.mxu0 0.0
  %1283 = vmatpush.msra.mxu0 0.0
  %1284 = vmatpush.msra.mxu0 0.0
  %1285 = vmatpush.msra.mxu0 0.0
  %1286 = vmatpush.msra.mxu0 0.0
  %1287 = vmatpush.msra.mxu0 0.0
  %1288 = vmatpush.msra.mxu0 0.0
  %1289 = vmatpush.msra.mxu0 0.0
  %1290 = vmatpush.msra.mxu0 0.0
  %1291 = vmatpush.msra.mxu0 0.0
  %1292 = vmatpush.msra.mxu0 0.0
  %1293 = vmatpush.msra.mxu0 0.0
  %1294 = vmatpush.msra.mxu0 0.0
  %1295 = vmatpush.msra.mxu0 0.0
  %1296 = vmatpush.msra.mxu0 %v1264
  %1297 = vmatmul.f32.gmra.mxu0 %v1276
  %v1298 = vpop.f32.mrf.mxu0
  %v1299 = vadd.f32 0.0, %v1298
  %1300 = vmatmul.f32.gmra.mxu0 %v1279
  %v1301 = vpop.f32.mrf.mxu0
  %v1302 = vadd.f32 0.0, %v1301
  %1303 = vdwg.mxu0
  %v1304 = vrot.slane %v1262, 1
  %v1305 = vrot.slane %v1263, 1
  %v1308 = vmul.f32 %v1299, %v1304
  %v1309 = vmul.f32 %v1302, %v1305
  %vm1310 = vcmask 63488
  %v1311 = vsel %vm1310, %v1308, 0.0
  %1312 = vadd.xlane.f32.xlu0 %v1311
  %v1313 = vpop.xlane.xlu0 %1312
  %v1314 = vsel %vm1310, %v1309, 0.0
  %1315 = vadd.xlane.f32.xlu0 %v1314
  %v1316 = vpop.xlane.xlu0 %1315
  %v1317 = vperm.slane %v1265, 0
  %v1318 = vrot.slane %v1263, 7
  %vm1319 = vcmask 1041409
  %v1320 = vsel %vm1319, %v1318, %v1262
  %v1322 = vmul.f32 %v1317, %v1320
  %vm1323 = vcmask 58368
  %v1324 = vsel %vm1323, %v1322, 0.0
  %1325 = vadd.xlane.f32.xlu0 %v1324
  %v1326 = vpop.xlane.xlu0 %1325
  %v1329 = vrot.slane %v1274, 7
  %v1330 = vsel %vm1319, %v1329, %v1271
  %v1332 = vadd.f32 %v1326, %v1330
  %v1335 = vrot.slane %v1313, 7
  %v1336 = vrot.slane %v1316, 7
  %v1339 = vadd.f32 %v1271, %v1335
  %v1340 = vadd.f32 %v1274, %v1336
  %1343 = vset.pattern.permute.xlu0 0
  %1344 = vperm.xlu0 %1343, %v1339
  %v1345 = vpop.permute.xlu0 %1344
  %1346 = vset.pattern.permute.xlu0 0
  %1347 = vperm.xlu0 %1346, %v1340
  %v1348 = vpop.permute.xlu0 %1347
  %v1349 = vperm.slane %v1345, %v1251
  %v1350 = vperm.slane %v1348, %v1251
  %v1351 = vsel %vm1319, %v1350, %v1349
  %v1353 = vmul.f32 %v94, %v1351
  %1355 = vrot.lane.b32.xlu0 %v1353, 127
  %v1356 = vpop.permute.xlu0 %1355
  %vm1358 = vcmask 50176
  %v1359 = vsel %vm1358, %v1356, 0.0
  %1360 = vadd.xlane.f32.xlu0 %v1359
  %v1361 = vpop.xlane.xlu0 %1360
  %v1362 = vadd.f32 %v1332, %v1361
  %1363 = vrot.lane.b32.xlu0 %v94, 127
  %v1364 = vpop.permute.xlu0 %1363
  %vm1366 = vcmask 56320
  %v1367 = vsel %vm1366, %v1364, 0.0
  %v1368 = vsub.f32 1.0, %v1367
  %v1369 = vmul.f32 %v94, %v1368
  %v1370 = vperm.slane %v1266, 0
  %v1371 = vmul.f32 %v1262, %v1370
  %v1372 = vmul.f32 %v1263, %v1370
  %v1373 = vsel %vm268, %v1371, 0.0
  %1374 = vadd.xlane.f32.xlu0 %v1373
  %v1375 = vpop.xlane.xlu0 %1374
  %v1376 = vsel %vm268, %v1372, 0.0
  %1377 = vadd.xlane.f32.xlu0 %v1376
  %v1378 = vpop.xlane.xlu0 %1377
  %v1381 = vperm.slane %v1375, %v1251
  %v1382 = vperm.slane %v1378, %v1251
  %v1383 = vsel %vm1319, %v1382, %v1381
  %v1385 = vmul.f32 %v1369, %v1383
  %v1386 = vsel %vm1323, %v1385, 0.0
  %1387 = vadd.xlane.f32.xlu0 %v1386
  %v1388 = vpop.xlane.xlu0 %1387
  %v1389 = vadd.f32 %v1362, %v1388
  %v1392 = vrot.slane %v1246, 7
  %v1393 = vsel %vm1319, %v1392, %v1243
  %v1395 = vadd.f32 %v1317, %v1393
  %v1396 = vperm.slane %v1395, 0
  %v1397 = vlaneseq
  %v1398 = vshrl.u32 %v1397, 7
  %1400 = vset.pattern.permute.xlu0 %v1398
  %1401 = vperm.xlu0 %1400, %v1396
  %v1402 = vpop.permute.xlu0 %1401
  %v1403 = vperm.slane %v1395, 1
  %v1404 = vlaneseq
  %v1405 = vshrl.u32 %v1404, 7
  %1407 = vset.pattern.permute.xlu0 %v1405
  %1408 = vperm.xlu0 %1407, %v1403
  %v1409 = vpop.permute.xlu0 %1408
  %v1410 = vadd.f32 %v1402, %v1264
  %v1411 = vadd.f32 %v1409, %v1264
  %v1412 = vperm.slane %v1243, 1
  %v1413 = vperm.slane %v1246, 1
  %v1414 = vadd.f32 %v1410, %v1412
  %v1415 = vadd.f32 %v1411, %v1413
  %v1416 = vsel %vm268, %v1414, -inf
  %v1417 = vrot.slane %v1416, 4
  %v1418 = vmax.f32 %v1416, %v1417
  %v1419 = vrot.slane %v1418, 2
  %v1420 = vmax.f32 %v1418, %v1419
  %v1421 = vrot.slane %v1420, 1
  %v1422 = vmax.f32 %v1420, %v1421
  %v1423 = vsel %vm268, %v1415, -inf
  %v1424 = vrot.slane %v1423, 4
  %v1425 = vmax.f32 %v1423, %v1424
  %v1426 = vrot.slane %v1425, 2
  %v1427 = vmax.f32 %v1425, %v1426
  %v1428 = vrot.slane %v1427, 1
  %v1429 = vmax.f32 %v1427, %v1428
  %v1430 = vsub.f32 %v1414, %v1422
  %v1431 = vsub.f32 %v1415, %v1429
  %v1432 = vmul.f32 %v1430, 1.442695
  %v1433 = vpow.pop %v1432
  %v1434 = vmul.f32 %v1431, 1.442695
  %v1435 = vpow.pop %v1434
  %v1436 = vsel %vm268, %v1433, 0.0
  %v1437 = vrot.slane %v1436, 4
  %v1438 = vadd.f32 %v1436, %v1437
  %v1439 = vrot.slane %v1438, 2
  %v1440 = vadd.f32 %v1438, %v1439
  %v1441 = vrot.slane %v1440, 1
  %v1442 = vadd.f32 %v1440, %v1441
  %v1443 = vsel %vm268, %v1435, 0.0
  %v1444 = vrot.slane %v1443, 4
  %v1445 = vadd.f32 %v1443, %v1444
  %v1446 = vrot.slane %v1445, 2
  %v1447 = vadd.f32 %v1445, %v1446
  %v1448 = vrot.slane %v1447, 1
  %v1449 = vadd.f32 %v1447, %v1448
  %v1450 = vlog2.pop %v1442
  %v1451 = vmul.f32 %v1450, 0.6931472
  %v1452 = vlog2.pop %v1449
  %v1453 = vmul.f32 %v1452, 0.6931472
  %v1454 = vadd.f32 %v1422, %v1451
  %v1455 = vadd.f32 %v1429, %v1453
  %vm1456 = vcmp.gt.f32.partialorder %v94, 0.0
  %v1457 = vsel %vm1456, 1, 0
  %1458 = vset.pattern.permute.xlu0 1
  %1459 = vperm.xlu0 %1458, %v1457
  %v1460 = vpop.permute.xlu0 %1459
  %vm1461 = vcmp.eq.s32.totalorder %v1460, 1
  %v1464 = vsel %vm1319, %v1455, %v1454
  %v1466 = vsel %vm1461, %v1464, %v1395
  %v1467 = vperm.slane %v1466, 0
  %v1468 = vlaneseq
  %v1469 = vshrl.u32 %v1468, 7
  %1471 = vset.pattern.permute.xlu0 %v1469
  %1472 = vperm.xlu0 %1471, %v1467
  %v1473 = vpop.permute.xlu0 %1472
  %v1474 = vperm.slane %v1466, 1
  %v1475 = vlaneseq
  %v1476 = vshrl.u32 %v1475, 7
  %1478 = vset.pattern.permute.xlu0 %v1476
  %1479 = vperm.xlu0 %1478, %v1474
  %v1480 = vpop.permute.xlu0 %1479
  %v1481 = vadd.f32 %v1473, %v1264
  %v1482 = vadd.f32 %v1480, %v1264
  %v1483 = vperm.slane %v1243, 2
  %v1484 = vperm.slane %v1246, 2
  %v1485 = vadd.f32 %v1481, %v1483
  %v1486 = vadd.f32 %v1482, %v1484
  %v1487 = vsel %vm268, %v1485, -inf
  %v1488 = vrot.slane %v1487, 4
  %v1489 = vmax.f32 %v1487, %v1488
  %v1490 = vrot.slane %v1489, 2
  %v1491 = vmax.f32 %v1489, %v1490
  %v1492 = vrot.slane %v1491, 1
  %v1493 = vmax.f32 %v1491, %v1492
  %v1494 = vsel %vm268, %v1486, -inf
  %v1495 = vrot.slane %v1494, 4
  %v1496 = vmax.f32 %v1494, %v1495
  %v1497 = vrot.slane %v1496, 2
  %v1498 = vmax.f32 %v1496, %v1497
  %v1499 = vrot.slane %v1498, 1
  %v1500 = vmax.f32 %v1498, %v1499
  %v1501 = vsub.f32 %v1485, %v1493
  %v1502 = vsub.f32 %v1486, %v1500
  %v1503 = vmul.f32 %v1501, 1.442695
  %v1504 = vpow.pop %v1503
  %v1505 = vmul.f32 %v1502, 1.442695
  %v1506 = vpow.pop %v1505
  %v1507 = vsel %vm268, %v1504, 0.0
  %v1508 = vrot.slane %v1507, 4
  %v1509 = vadd.f32 %v1507, %v1508
  %v1510 = vrot.slane %v1509, 2
  %v1511 = vadd.f32 %v1509, %v1510
  %v1512 = vrot.slane %v1511, 1
  %v1513 = vadd.f32 %v1511, %v1512
  %v1514 = vsel %vm268, %v1506, 0.0
  %v1515 = vrot.slane %v1514, 4
  %v1516 = vadd.f32 %v1514, %v1515
  %v1517 = vrot.slane %v1516, 2
  %v1518 = vadd.f32 %v1516, %v1517
  %v1519 = vrot.slane %v1518, 1
  %v1520 = vadd.f32 %v1518, %v1519
  %v1521 = vlog2.pop %v1513
  %v1522 = vmul.f32 %v1521, 0.6931472
  %v1523 = vlog2.pop %v1520
  %v1524 = vmul.f32 %v1523, 0.6931472
  %v1525 = vadd.f32 %v1493, %v1522
  %v1526 = vadd.f32 %v1500, %v1524
  %1527 = vset.pattern.permute.xlu0 2
  %1528 = vperm.xlu0 %1527, %v1457
  %v1529 = vpop.permute.xlu0 %1528
  %vm1530 = vcmp.eq.s32.totalorder %v1529, 1
  %v1533 = vsel %vm1319, %v1526, %v1525
  %v1535 = vsel %vm1530, %v1533, %v1466
  %v1536 = vperm.slane %v1535, 0
  %v1537 = vlaneseq
  %v1538 = vshrl.u32 %v1537, 7
  %1540 = vset.pattern.permute.xlu0 %v1538
  %1541 = vperm.xlu0 %1540, %v1536
  %v1542 = vpop.permute.xlu0 %1541
  %v1543 = vperm.slane %v1535, 1
  %v1544 = vlaneseq
  %v1545 = vshrl.u32 %v1544, 7
  %1547 = vset.pattern.permute.xlu0 %v1545
  %1548 = vperm.xlu0 %1547, %v1543
  %v1549 = vpop.permute.xlu0 %1548
  %v1550 = vadd.f32 %v1542, %v1264
  %v1551 = vadd.f32 %v1549, %v1264
  %v1552 = vperm.slane %v1243, 3
  %v1553 = vperm.slane %v1246, 3
  %v1554 = vadd.f32 %v1550, %v1552
  %v1555 = vadd.f32 %v1551, %v1553
  %v1556 = vsel %vm268, %v1554, -inf
  %v1557 = vrot.slane %v1556, 4
  %v1558 = vmax.f32 %v1556, %v1557
  %v1559 = vrot.slane %v1558, 2
  %v1560 = vmax.f32 %v1558, %v1559
  %v1561 = vrot.slane %v1560, 1
  %v1562 = vmax.f32 %v1560, %v1561
  %v1563 = vsel %vm268, %v1555, -inf
  %v1564 = vrot.slane %v1563, 4
  %v1565 = vmax.f32 %v1563, %v1564
  %v1566 = vrot.slane %v1565, 2
  %v1567 = vmax.f32 %v1565, %v1566
  %v1568 = vrot.slane %v1567, 1
  %v1569 = vmax.f32 %v1567, %v1568
  %v1570 = vsub.f32 %v1554, %v1562
  %v1571 = vsub.f32 %v1555, %v1569
  %v1572 = vmul.f32 %v1570, 1.442695
  %v1573 = vpow.pop %v1572
  %v1574 = vmul.f32 %v1571, 1.442695
  %v1575 = vpow.pop %v1574
  %v1576 = vsel %vm268, %v1573, 0.0
  %v1577 = vrot.slane %v1576, 4
  %v1578 = vadd.f32 %v1576, %v1577
  %v1579 = vrot.slane %v1578, 2
  %v1580 = vadd.f32 %v1578, %v1579
  %v1581 = vrot.slane %v1580, 1
  %v1582 = vadd.f32 %v1580, %v1581
  %v1583 = vsel %vm268, %v1575, 0.0
  %v1584 = vrot.slane %v1583, 4
  %v1585 = vadd.f32 %v1583, %v1584
  %v1586 = vrot.slane %v1585, 2
  %v1587 = vadd.f32 %v1585, %v1586
  %v1588 = vrot.slane %v1587, 1
  %v1589 = vadd.f32 %v1587, %v1588
  %v1590 = vlog2.pop %v1582
  %v1591 = vmul.f32 %v1590, 0.6931472
  %v1592 = vlog2.pop %v1589
  %v1593 = vmul.f32 %v1592, 0.6931472
  %v1594 = vadd.f32 %v1562, %v1591
  %v1595 = vadd.f32 %v1569, %v1593
  %1596 = vset.pattern.permute.xlu0 3
  %1597 = vperm.xlu0 %1596, %v1457
  %v1598 = vpop.permute.xlu0 %1597
  %vm1599 = vcmp.eq.s32.totalorder %v1598, 1
  %v1602 = vsel %vm1319, %v1595, %v1594
  %v1604 = vsel %vm1599, %v1602, %v1535
  %v1605 = vperm.slane %v1604, 0
  %v1606 = vlaneseq
  %v1607 = vshrl.u32 %v1606, 7
  %1609 = vset.pattern.permute.xlu0 %v1607
  %1610 = vperm.xlu0 %1609, %v1605
  %v1611 = vpop.permute.xlu0 %1610
  %v1612 = vperm.slane %v1604, 1
  %v1613 = vlaneseq
  %v1614 = vshrl.u32 %v1613, 7
  %1616 = vset.pattern.permute.xlu0 %v1614
  %1617 = vperm.xlu0 %1616, %v1612
  %v1618 = vpop.permute.xlu0 %1617
  %v1619 = vadd.f32 %v1611, %v1264
  %v1620 = vadd.f32 %v1618, %v1264
  %v1621 = vperm.slane %v1243, 4
  %v1622 = vperm.slane %v1246, 4
  %v1623 = vadd.f32 %v1619, %v1621
  %v1624 = vadd.f32 %v1620, %v1622
  %v1625 = vsel %vm268, %v1623, -inf
  %v1626 = vrot.slane %v1625, 4
  %v1627 = vmax.f32 %v1625, %v1626
  %v1628 = vrot.slane %v1627, 2
  %v1629 = vmax.f32 %v1627, %v1628
  %v1630 = vrot.slane %v1629, 1
  %v1631 = vmax.f32 %v1629, %v1630
  %v1632 = vsel %vm268, %v1624, -inf
  %v1633 = vrot.slane %v1632, 4
  %v1634 = vmax.f32 %v1632, %v1633
  %v1635 = vrot.slane %v1634, 2
  %v1636 = vmax.f32 %v1634, %v1635
  %v1637 = vrot.slane %v1636, 1
  %v1638 = vmax.f32 %v1636, %v1637
  %v1639 = vsub.f32 %v1623, %v1631
  %v1640 = vsub.f32 %v1624, %v1638
  %v1641 = vmul.f32 %v1639, 1.442695
  %v1642 = vpow.pop %v1641
  %v1643 = vmul.f32 %v1640, 1.442695
  %v1644 = vpow.pop %v1643
  %v1645 = vsel %vm268, %v1642, 0.0
  %v1646 = vrot.slane %v1645, 4
  %v1647 = vadd.f32 %v1645, %v1646
  %v1648 = vrot.slane %v1647, 2
  %v1649 = vadd.f32 %v1647, %v1648
  %v1650 = vrot.slane %v1649, 1
  %v1651 = vadd.f32 %v1649, %v1650
  %v1652 = vsel %vm268, %v1644, 0.0
  %v1653 = vrot.slane %v1652, 4
  %v1654 = vadd.f32 %v1652, %v1653
  %v1655 = vrot.slane %v1654, 2
  %v1656 = vadd.f32 %v1654, %v1655
  %v1657 = vrot.slane %v1656, 1
  %v1658 = vadd.f32 %v1656, %v1657
  %v1659 = vlog2.pop %v1651
  %v1660 = vmul.f32 %v1659, 0.6931472
  %v1661 = vlog2.pop %v1658
  %v1662 = vmul.f32 %v1661, 0.6931472
  %v1663 = vadd.f32 %v1631, %v1660
  %v1664 = vadd.f32 %v1638, %v1662
  %1665 = vset.pattern.permute.xlu0 4
  %1666 = vperm.xlu0 %1665, %v1457
  %v1667 = vpop.permute.xlu0 %1666
  %vm1668 = vcmp.eq.s32.totalorder %v1667, 1
  %v1671 = vsel %vm1319, %v1664, %v1663
  %v1673 = vsel %vm1668, %v1671, %v1604
  %v1674 = vperm.slane %v1673, 0
  %v1675 = vlaneseq
  %v1676 = vshrl.u32 %v1675, 7
  %1678 = vset.pattern.permute.xlu0 %v1676
  %1679 = vperm.xlu0 %1678, %v1674
  %v1680 = vpop.permute.xlu0 %1679
  %v1681 = vperm.slane %v1673, 1
  %v1682 = vlaneseq
  %v1683 = vshrl.u32 %v1682, 7
  %1685 = vset.pattern.permute.xlu0 %v1683
  %1686 = vperm.xlu0 %1685, %v1681
  %v1687 = vpop.permute.xlu0 %1686
  %v1688 = vadd.f32 %v1680, %v1264
  %v1689 = vadd.f32 %v1687, %v1264
  %v1690 = vperm.slane %v1243, 5
  %v1691 = vperm.slane %v1246, 5
  %v1692 = vadd.f32 %v1688, %v1690
  %v1693 = vadd.f32 %v1689, %v1691
  %v1694 = vsel %vm268, %v1692, -inf
  %v1695 = vrot.slane %v1694, 4
  %v1696 = vmax.f32 %v1694, %v1695
  %v1697 = vrot.slane %v1696, 2
  %v1698 = vmax.f32 %v1696, %v1697
  %v1699 = vrot.slane %v1698, 1
  %v1700 = vmax.f32 %v1698, %v1699
  %v1701 = vsel %vm268, %v1693, -inf
  %v1702 = vrot.slane %v1701, 4
  %v1703 = vmax.f32 %v1701, %v1702
  %v1704 = vrot.slane %v1703, 2
  %v1705 = vmax.f32 %v1703, %v1704
  %v1706 = vrot.slane %v1705, 1
  %v1707 = vmax.f32 %v1705, %v1706
  %v1708 = vsub.f32 %v1692, %v1700
  %v1709 = vsub.f32 %v1693, %v1707
  %v1710 = vmul.f32 %v1708, 1.442695
  %v1711 = vpow.pop %v1710
  %v1712 = vmul.f32 %v1709, 1.442695
  %v1713 = vpow.pop %v1712
  %v1714 = vsel %vm268, %v1711, 0.0
  %v1715 = vrot.slane %v1714, 4
  %v1716 = vadd.f32 %v1714, %v1715
  %v1717 = vrot.slane %v1716, 2
  %v1718 = vadd.f32 %v1716, %v1717
  %v1719 = vrot.slane %v1718, 1
  %v1720 = vadd.f32 %v1718, %v1719
  %v1721 = vsel %vm268, %v1713, 0.0
  %v1722 = vrot.slane %v1721, 4
  %v1723 = vadd.f32 %v1721, %v1722
  %v1724 = vrot.slane %v1723, 2
  %v1725 = vadd.f32 %v1723, %v1724
  %v1726 = vrot.slane %v1725, 1
  %v1727 = vadd.f32 %v1725, %v1726
  %v1728 = vlog2.pop %v1720
  %v1729 = vmul.f32 %v1728, 0.6931472
  %v1730 = vlog2.pop %v1727
  %v1731 = vmul.f32 %v1730, 0.6931472
  %v1732 = vadd.f32 %v1700, %v1729
  %v1733 = vadd.f32 %v1707, %v1731
  %1734 = vset.pattern.permute.xlu0 5
  %1735 = vperm.xlu0 %1734, %v1457
  %v1736 = vpop.permute.xlu0 %1735
  %vm1737 = vcmp.eq.s32.totalorder %v1736, 1
  %v1740 = vsel %vm1319, %v1733, %v1732
  %v1742 = vsel %vm1737, %v1740, %v1673
  %v1743 = vperm.slane %v1742, 0
  %v1744 = vlaneseq
  %v1745 = vshrl.u32 %v1744, 7
  %1747 = vset.pattern.permute.xlu0 %v1745
  %1748 = vperm.xlu0 %1747, %v1743
  %v1749 = vpop.permute.xlu0 %1748
  %v1750 = vperm.slane %v1742, 1
  %v1751 = vlaneseq
  %v1752 = vshrl.u32 %v1751, 7
  %1754 = vset.pattern.permute.xlu0 %v1752
  %1755 = vperm.xlu0 %1754, %v1750
  %v1756 = vpop.permute.xlu0 %1755
  %v1757 = vadd.f32 %v1749, %v1264
  %v1758 = vadd.f32 %v1756, %v1264
  %v1759 = vperm.slane %v1243, 6
  %v1760 = vperm.slane %v1246, 6
  %v1761 = vadd.f32 %v1757, %v1759
  %v1762 = vadd.f32 %v1758, %v1760
  %v1763 = vsel %vm268, %v1761, -inf
  %v1764 = vrot.slane %v1763, 4
  %v1765 = vmax.f32 %v1763, %v1764
  %v1766 = vrot.slane %v1765, 2
  %v1767 = vmax.f32 %v1765, %v1766
  %v1768 = vrot.slane %v1767, 1
  %v1769 = vmax.f32 %v1767, %v1768
  %v1770 = vsel %vm268, %v1762, -inf
  %v1771 = vrot.slane %v1770, 4
  %v1772 = vmax.f32 %v1770, %v1771
  %v1773 = vrot.slane %v1772, 2
  %v1774 = vmax.f32 %v1772, %v1773
  %v1775 = vrot.slane %v1774, 1
  %v1776 = vmax.f32 %v1774, %v1775
  %v1777 = vsub.f32 %v1761, %v1769
  %v1778 = vsub.f32 %v1762, %v1776
  %v1779 = vmul.f32 %v1777, 1.442695
  %v1780 = vpow.pop %v1779
  %v1781 = vmul.f32 %v1778, 1.442695
  %v1782 = vpow.pop %v1781
  %v1783 = vsel %vm268, %v1780, 0.0
  %v1784 = vrot.slane %v1783, 4
  %v1785 = vadd.f32 %v1783, %v1784
  %v1786 = vrot.slane %v1785, 2
  %v1787 = vadd.f32 %v1785, %v1786
  %v1788 = vrot.slane %v1787, 1
  %v1789 = vadd.f32 %v1787, %v1788
  %v1790 = vsel %vm268, %v1782, 0.0
  %v1791 = vrot.slane %v1790, 4
  %v1792 = vadd.f32 %v1790, %v1791
  %v1793 = vrot.slane %v1792, 2
  %v1794 = vadd.f32 %v1792, %v1793
  %v1795 = vrot.slane %v1794, 1
  %v1796 = vadd.f32 %v1794, %v1795
  %v1797 = vlog2.pop %v1789
  %v1798 = vmul.f32 %v1797, 0.6931472
  %v1799 = vlog2.pop %v1796
  %v1800 = vmul.f32 %v1799, 0.6931472
  %v1801 = vadd.f32 %v1769, %v1798
  %v1802 = vadd.f32 %v1776, %v1800
  %1803 = vset.pattern.permute.xlu0 6
  %1804 = vperm.xlu0 %1803, %v1457
  %v1805 = vpop.permute.xlu0 %1804
  %vm1806 = vcmp.eq.s32.totalorder %v1805, 1
  %v1809 = vsel %vm1319, %v1802, %v1801
  %v1811 = vsel %vm1806, %v1809, %v1742
  %v1812 = vperm.slane %v1811, 0
  %v1813 = vlaneseq
  %v1814 = vshrl.u32 %v1813, 7
  %1816 = vset.pattern.permute.xlu0 %v1814
  %1817 = vperm.xlu0 %1816, %v1812
  %v1818 = vpop.permute.xlu0 %1817
  %v1819 = vperm.slane %v1811, 1
  %v1820 = vlaneseq
  %v1821 = vshrl.u32 %v1820, 7
  %1823 = vset.pattern.permute.xlu0 %v1821
  %1824 = vperm.xlu0 %1823, %v1819
  %v1825 = vpop.permute.xlu0 %1824
  %v1826 = vadd.f32 %v1818, %v1264
  %v1827 = vadd.f32 %v1825, %v1264
  %v1828 = vperm.slane %v1243, 7
  %v1829 = vperm.slane %v1246, 7
  %v1830 = vadd.f32 %v1826, %v1828
  %v1831 = vadd.f32 %v1827, %v1829
  %v1832 = vsel %vm268, %v1830, -inf
  %v1833 = vrot.slane %v1832, 4
  %v1834 = vmax.f32 %v1832, %v1833
  %v1835 = vrot.slane %v1834, 2
  %v1836 = vmax.f32 %v1834, %v1835
  %v1837 = vrot.slane %v1836, 1
  %v1838 = vmax.f32 %v1836, %v1837
  %v1839 = vsel %vm268, %v1831, -inf
  %v1840 = vrot.slane %v1839, 4
  %v1841 = vmax.f32 %v1839, %v1840
  %v1842 = vrot.slane %v1841, 2
  %v1843 = vmax.f32 %v1841, %v1842
  %v1844 = vrot.slane %v1843, 1
  %v1845 = vmax.f32 %v1843, %v1844
  %v1846 = vsub.f32 %v1830, %v1838
  %v1847 = vsub.f32 %v1831, %v1845
  %v1848 = vmul.f32 %v1846, 1.442695
  %v1849 = vpow.pop %v1848
  %v1850 = vmul.f32 %v1847, 1.442695
  %v1851 = vpow.pop %v1850
  %v1852 = vsel %vm268, %v1849, 0.0
  %v1853 = vrot.slane %v1852, 4
  %v1854 = vadd.f32 %v1852, %v1853
  %v1855 = vrot.slane %v1854, 2
  %v1856 = vadd.f32 %v1854, %v1855
  %v1857 = vrot.slane %v1856, 1
  %v1858 = vadd.f32 %v1856, %v1857
  %v1859 = vsel %vm268, %v1851, 0.0
  %v1860 = vrot.slane %v1859, 4
  %v1861 = vadd.f32 %v1859, %v1860
  %v1862 = vrot.slane %v1861, 2
  %v1863 = vadd.f32 %v1861, %v1862
  %v1864 = vrot.slane %v1863, 1
  %v1865 = vadd.f32 %v1863, %v1864
  %v1866 = vlog2.pop %v1858
  %v1867 = vmul.f32 %v1866, 0.6931472
  %v1868 = vlog2.pop %v1865
  %v1869 = vmul.f32 %v1868, 0.6931472
  %v1870 = vadd.f32 %v1838, %v1867
  %v1871 = vadd.f32 %v1845, %v1869
  %1872 = vset.pattern.permute.xlu0 7
  %1873 = vperm.xlu0 %1872, %v1457
  %v1874 = vpop.permute.xlu0 %1873
  %vm1875 = vcmp.eq.s32.totalorder %v1874, 1
  %v1878 = vsel %vm1319, %v1871, %v1870
  %v1880 = vsel %vm1875, %v1878, %v1811
  %v1881 = vadd.f32 %v1880, %v1370
  %v1882 = vsel %vm1323, %v1881, -inf
  %1883 = vmax.xlane.f32.xlu0 %v1882
  %v1884 = vpop.xlane.xlu0 %1883
  %v1885 = vsub.f32 %v1881, %v1884
  %v1886 = vmul.f32 %v1885, 1.442695
  %v1887 = vpow.pop %v1886
  %v1888 = vsel %vm1323, %v1887, 0.0
  %1889 = vadd.xlane.f32.xlu0 %v1888
  %v1890 = vpop.xlane.xlu0 %1889
  %v1891 = vlog2.pop %v1890
  %v1892 = vmul.f32 %v1891, 0.6931472
  %v1893 = vadd.f32 %v1892, %v1884
  %v1894 = vsub.f32 %v1389, %v1893
  %vm1895 = vcmask 1024
  %v1896 = vsel %vm1895, %v1894, 0.0
  %v1897 = vrot.slane %v1896, 4
  %v1898 = vadd.f32 %v1896, %v1897
  %v1899 = vrot.slane %v1898, 2
  %v1900 = vadd.f32 %v1898, %v1899
  %v1901 = vrot.slane %v1900, 1
  %v1902 = vadd.f32 %v1900, %v1901
  %v1903 = vrcp.pop 2.0
  %v1904 = vmul.f32 2.0, %v1903
  %v1905 = vsub.f32 1.0, %v1904
  %v1906 = vmul.f32 %v1903, %v1905
  %v1907 = vadd.f32 %v1903, %v1906
  %vm1908 = vweird.f32 %v1903
  %v1909 = vsel %vm1908, %v1903, %v1907
  %v1910 = vmul.f32 %v1902, %v1909
  %v1911 = vsub.f32 0.0, %v1910
  %1912 = vst [vmem:[%s9] sm:$0xff] %v1243
  %1913 = vst [vmem:[%s9 + $0x8] sm:$0xff] %v1246
  %1915 = vset.pattern.permute.xlu0 0
  %1916 = vperm.xlu0 %1915, %v1911
  %v1917 = vpop.permute.xlu0 %1916
  %v1919 = vadd.f32 %v1917, 0.0
  %1920 = vst [vmem:[%s9 + $0x10] sm:$0xff] %v1919
  // Predicated region
  $region38: #{bert_crf_forward.1} parent=0 // pred_check
    _
  $region39: #{bert_crf_forward.1} parent=0 // pred_check_branch
    %1922 = sbr.rel (0) target = $region41
  $region40: #{bert_crf_forward.1} parent=0 // pred_region
    _
  $region41: #{bert_crf_forward.1} parent=0 // pred_fallthru
    _
  // Predicated region
  $region42: #{bert_crf_forward.1} parent=0 // pred_check
    _
  $region43: #{bert_crf_forward.1} parent=0 // pred_check_branch
    %1924 = sbr.rel (0) target = $region45
  $region44: #{bert_crf_forward.1} parent=0 // pred_region
    _
  $region45: #{bert_crf_forward.1} parent=0 // pred_fallthru
    _

</llo_original>
